<compile_context>
chip_gen: v7x
topology: tpu7x:2x2x1
jax: 0.10.0
libtpu: 0.0.40
codegen_flags: <defaults>
</compile_context>

<pallas_src>
import numpy as np
import ml_dtypes
import jax
import jax.numpy as jnp
from jax.experimental import pallas as pl
from jax.experimental.pallas import tpu as pltpu

LATENT_DIM = 64   # hyperparams['latent_dim'] (GCN out_channels)
HIDDEN = 32       # hyperparams['hidden']
GCN_IN = 5        # random node features of dim 5 (per reference forward)
GCN_HID = 1       # GCN hidden_channels (must be 1 for the rank-1 head fold)
LANE = 128
HI = jax.lax.Precision.HIGHEST


# ----------------------------------------------------------------------------
# sizing helpers
# ----------------------------------------------------------------------------
def _round_up(x, m):
    return ((x + m - 1) // m) * m


def _vmem_capacity_bytes():
    try:
        info = pltpu.get_tpu_info()
        return int(getattr(info, "vmem_capacity_bytes", 64 << 20))
    except Exception:
        return 64 << 20   # conservative (v7x-sized) default


def _pick_tile(n128, cap_bytes):
    """Column-tile for the (n128, tile) bf16 adjacency block (double-buffered).

    Returns (tile, n_c_pad).  Prefers a 128-multiple divisor of n128 so the
    column padding is exactly n128 (no round_up(n, tile) blow-up)."""
    budget = cap_bytes // 2                       # adjacency 2-buf budget
    t_max = (budget // (4 * n128)) // LANE * LANE
    t_max = int(max(LANE, min(t_max, n128)))
    # TODO(synk): for n128 > budget/(4*128) a 2-D (row, col) K-tiled grid with an
    #             f32 accumulator would be needed; not implemented.
    for t in range(t_max, LANE - 1, -LANE):
        if n128 % t == 0:
            if 2 * t >= t_max:                    # divisor close enough to max
                return t, n128
            break
    return t_max, _round_up(n128, t_max)


def _fused_need_bytes(n128):
    return (4 * n128 * n128            # adj bf16, 2 buffers (conservative)
            + 2 * n128 * LANE * 4      # poolT (lane-padded to 128), 2 buffers
            + 2 * 8 * n128 * 4         # repT
            + 4 * 8 * n128 * (2 + 4)   # zT / q output
            + (2 << 20))


# ----------------------------------------------------------------------------
# Pallas kernels
# ----------------------------------------------------------------------------
def _gcn_layer1_kernel(b1_ref, zT_ref, adj_ref, h1T_ref):
    """h1^T[:, tile] = relu( zT @ A_hat[:, tile] + b1 ), emitted in bf16."""
    acc = jnp.dot(zT_ref[...], adj_ref[...],
                  preferred_element_type=jnp.float32)          # (1, TILE) f32
    h1T_ref[...] = jnp.maximum(acc + b1_ref[0], 0.0).astype(h1T_ref.dtype)


def _folded_head(ah1T, rpT, w2a_ref, w2b_ref, ch_ref, wout_ref, bout_ref):
    """q = sum_h wout[h]*relu(w2a[h]*ah1 + w2b[h]*rp + c[h]) + bout.

    32-step scalar loop over (1, tile) temporaries -> no (HIDDEN, tile) f32
    intermediate, no vreg spills."""
    acc = jnp.zeros_like(ah1T)
    for h in range(HIDDEN):
        t = jnp.maximum(w2a_ref[h] * ah1T + w2b_ref[h] * rpT + ch_ref[h], 0.0)
        acc = acc + wout_ref[h] * t
    return acc + bout_ref[0]


def _qhead_kernel(bout_ref, w2a_ref, w2b_ref, ch_ref, wout_ref,
                  h1T_ref, adj_ref, rpT_ref, qT_ref):
    """Second A_hat propagation + folded (concat -> linear_1 -> relu -> linear_out)."""
    ah1T = jnp.dot(h1T_ref[...], adj_ref[...],
                   preferred_element_type=jnp.float32)         # (1, TILE) f32
    qT_ref[...] = _folded_head(ah1T, rpT_ref[...],
                               w2a_ref, w2b_ref, ch_ref, wout_ref, bout_ref)


def _fused_kernel(b1_ref, bout_ref, w2a_ref, w2b_ref, ch_ref, wout_ref,
                  zT_ref, adj_ref, poolT_ref, repT_ref, qT_ref):
    """Whole forward with A_hat resident in VMEM (fetched from HBM once)."""
    adj = adj_ref[...]                                         # (N, N) bf16
    h1T = jnp.maximum(jnp.dot(zT_ref[...], adj,
                              preferred_element_type=jnp.float32)
                      + b1_ref[0], 0.0)                        # (1, N) f32
    ah1T = jnp.dot(h1T.astype(jnp.bfloat16), adj,
                   preferred_element_type=jnp.float32)         # (1, N) f32
    pooledT = jnp.dot(ah1T, poolT_ref[...],
                      preferred_element_type=jnp.float32)      # (1, B)
    rpT = jnp.dot(pooledT, repT_ref[...],
                  preferred_element_type=jnp.float32)          # (1, N)
    qT_ref[...] = _folded_head(ah1T, rpT,
                               w2a_ref, w2b_ref, ch_ref, wout_ref, bout_ref)


# ----------------------------------------------------------------------------
# jitted forward builders (one per batch geometry, reused across heads/calls)
# ----------------------------------------------------------------------------
def _build_forward(n, b, n128, n_c_pad, tile, fused, cap):
    grid = (n_c_pad // tile,)
    adj_bytes = 2 * n128 * n_c_pad

    if fused:
        need = _fused_need_bytes(n128)
    else:
        need = 4 * n128 * tile + 64 * n128 + 256 * tile + (2 << 20)
    vmem_limit = int(min(cap * 3 // 4, max(32 << 20, need)))

    cp_tiled = pltpu.CompilerParams(dimension_semantics=("parallel",),
                                    vmem_limit_bytes=vmem_limit)
    cp_fused = pltpu.CompilerParams(dimension_semantics=("arbitrary",),
                                    vmem_limit_bytes=vmem_limit)

    cost1 = pl.CostEstimate(flops=int(2 * n128 * n_c_pad), transcendentals=0,
                            bytes_accessed=int(adj_bytes + 4 * n_c_pad))
    cost2 = pl.CostEstimate(flops=int(2 * n128 * n_c_pad + 6 * HIDDEN * n_c_pad),
                            transcendentals=0,
                            bytes_accessed=int(adj_bytes + 10 * n_c_pad))
    costf = pl.CostEstimate(flops=int(4 * n128 * n128 + 6 * HIDDEN * n128),
                            transcendentals=0,
                            bytes_accessed=int(adj_bytes + 16 * n128))

    smem = pl.BlockSpec(memory_space=pltpu.MemorySpace.SMEM)
    adj_spec = pl.BlockSpec((n128, tile), lambda i: (0, i))
    vecN = pl.BlockSpec((1, n128), lambda i: (0, 0))        # tile-invariant row
    vec_tile = pl.BlockSpec((1, tile), lambda i: (0, i))    # lane-dense output

    def fwd(x, batch, gcn, head):
        # node features -> per-node scalar z = x @ w1 (hoisted out of the grid)
        z = jnp.dot(x, gcn["w1"], precision=HI)                      # (n,)
        zT = jnp.zeros((1, n128), jnp.bfloat16).at[0, :n].set(
            z.astype(jnp.bfloat16))

        if fused:
            qT = pl.pallas_call(
                _fused_kernel, grid=(1,),
                out_shape=jax.ShapeDtypeStruct((1, n128), jnp.float32),
                in_specs=[smem] * 6 + [
                    pl.BlockSpec((1, n128), lambda i: (0, 0)),
                    pl.BlockSpec((n128, n128), lambda i: (0, 0)),
                    pl.BlockSpec((n128, b), lambda i: (0, 0)),
                    pl.BlockSpec((b, n128), lambda i: (0, 0))],
                out_specs=pl.BlockSpec((1, n128), lambda i: (0, 0)),
                compiler_params=cp_fused, cost_estimate=costf,
            )(gcn["b1"], head["bout"], head["w2a"], head["w2b"], head["ch"],
              head["wout"], zT, batch["adj"], batch["poolT"], batch["repT"])
        else:
            # pass 1: first propagation -> h1^T in bf16
            h1T = pl.pallas_call(
                _gcn_layer1_kernel, grid=grid,
                out_shape=jax.ShapeDtypeStruct((1, n_c_pad), jnp.bfloat16),
                in_specs=[smem, vecN, adj_spec],
                out_specs=vec_tile,
                compiler_params=cp_tiled, cost_estimate=cost1,
            )(gcn["b1"], zT, batch["adj"])

            # hoisted mean-pool / rep_global_embed (tiny XLA matmuls)
            pooledT = jnp.dot(h1T.astype(jnp.float32), batch["adjpoolT"],
                              precision=HI)                        # (1, B)
            rpT = jnp.dot(pooledT, batch["repT"], precision=HI)    # (1, n_c_pad)
            h1_rows = h1T[:, :n128]                                 # contraction rows

            # pass 2: second propagation + folded Q-head
            qT = pl.pallas_call(
                _qhead_kernel, grid=grid,
                out_shape=jax.ShapeDtypeStruct((1, n_c_pad), jnp.float32),
                in_specs=[smem] * 5 + [vecN, adj_spec, vec_tile],
                out_specs=vec_tile,
                compiler_params=cp_tiled, cost_estimate=cost2,
            )(head["bout"], head["w2a"], head["w2b"], head["ch"], head["wout"],
              h1_rows, batch["adj"], rpT)

        return qT[0, :n].reshape(n, 1)

    return jax.jit(fwd)


# ----------------------------------------------------------------------------
# Parameter init (PyTorch-style uniform(+-1/sqrt(fan_in))) + head folding
# ----------------------------------------------------------------------------
def _u(key, shape, fan_in):
    bnd = 1.0 / np.sqrt(fan_in)
    return jax.random.uniform(key, shape, jnp.float32, -bnd, bnd)


def init_nstep_qnet_params(key, num_steps):
    ks = jax.random.split(key, 4 + 4 * num_steps)
    w1 = _u(ks[0], (GCN_IN,), GCN_IN)
    b1 = _u(ks[1], (1,), GCN_IN)
    w2 = _u(ks[2], (GCN_HID, LATENT_DIM), GCN_HID)
    b2 = _u(ks[3], (1, LATENT_DIM), GCN_HID)
    gcn_dev = {"w1": w1, "b1": b1}
    gcn_raw = {"w1": np.asarray(w1), "b1": np.asarray(b1),
               "w2": np.asarray(w2), "b2": np.asarray(b2)}

    heads_dev, heads_raw = [], []
    for t in range(num_steps):
        kk = ks[4 + 4 * t: 8 + 4 * t]
        wl1 = _u(kk[0], (2 * LATENT_DIM, HIDDEN), 2 * LATENT_DIM)
        bl1 = _u(kk[1], (1, HIDDEN), 2 * LATENT_DIM)
        wout = _u(kk[2], (HIDDEN, 1), HIDDEN)
        bout = _u(kk[3], (1,), HIDDEN)
        wl1a, wl1b = wl1[:LATENT_DIM], wl1[LATENT_DIM:]
        # exact algebraic fold of GCN layer 2 (rank-1, GCN_HID == 1) + linear_1
        heads_dev.append({
            "w2a": (w2 @ wl1a).reshape(-1),                           # (H,)
            "w2b": (w2 @ wl1b).reshape(-1),                           # (H,)
            "ch": (b2 @ wl1a + b2 @ wl1b + bl1).reshape(-1),          # (H,)
            "wout": wout.reshape(-1),                                 # (H,)
            "bout": bout,                                             # (1,)
        })
        heads_raw.append({"wl1": np.asarray(wl1), "bl1": np.asarray(bl1),
                          "wout": np.asarray(wout), "bout": np.asarray(bout)})
    return gcn_dev, gcn_raw, heads_dev, heads_raw


# ----------------------------------------------------------------------------
# pure-numpy reference (mirrors the kernel's bf16 rounding points)
# ----------------------------------------------------------------------------
def _bf16_round(a):
    return np.asarray(a, np.float32).astype(ml_dtypes.bfloat16).astype(np.float64)


def reference_forward(adj, x, pool, rep, gcn_raw, head_raw):
    A = _bf16_round(adj)
    z = _bf16_round(np.asarray(x, np.float64) @ gcn_raw["w1"].astype(np.float64))
    h1 = _bf16_round(np.maximum(A @ z + np.float64(gcn_raw["b1"][0]), 0.0))
    ah1 = A @ h1
    w2 = gcn_raw["w2"].astype(np.float64)
    b2 = gcn_raw["b2"].astype(np.float64)
    embed = ah1[:, None] @ w2 + b2                              # (N, 64)
    graph_embed = pool.astype(np.float64) @ embed               # (B, 64) mean pool
    rep_ge = rep.astype(np.float64) @ graph_embed               # (N, 64)
    cat = np.concatenate([embed, rep_ge], axis=1)               # (N, 128)
    h = np.maximum(cat @ head_raw["wl1"].astype(np.float64)
                   + head_raw["bl1"].astype(np.float64), 0.0)
    return h @ head_raw["wout"].astype(np.float64) + np.float64(head_raw["bout"][0])


# ----------------------------------------------------------------------------
# Host-side graph glue (batching, normalized adjacency, pool/rep matrices)
# ----------------------------------------------------------------------------
def build_batch(graph_edge_lists, graph_sizes):
    n_total = int(sum(graph_sizes))
    bsz = len(graph_sizes)
    a = np.zeros((n_total, n_total), np.float32)
    pool = np.zeros((bsz, n_total), np.float32)
    rep = np.zeros((n_total, bsz), np.float32)
    prefix_sum = np.cumsum(graph_sizes).astype(np.int64)
    off = 0
    for gi, (edges, nn_) in enumerate(zip(graph_edge_lists, graph_sizes)):
        for (u, v) in edges:
            a[off + u, off + v] = 1.0
            a[off + v, off + u] = 1.0
        pool[gi, off:off + nn_] = 1.0 / nn_     # global mean pool
        rep[off:off + nn_, gi] = 1.0            # rep_global_embed
        off += nn_
    a_hat = a + np.eye(n_total, dtype=np.float32)
    d_inv_sqrt = 1.0 / np.sqrt(a_hat.sum(axis=1))
    adj_norm = (a_hat * d_inv_sqrt[:, None]) * d_inv_sqrt[None, :]
    return adj_norm, pool, rep, prefix_sum


def greedy_actions_np(raw_pred, prefix_sum, banned_list=None):
    q = np.asarray(raw_pred).reshape(-1).copy()
    offset = 0
    for i in range(len(prefix_sum)):
        if banned_list is not None and banned_list[i] is not None:
            for j in banned_list[i]:
                q[offset + j] = np.finfo(np.float32).min
        offset = int(prefix_sum[i])
    actions, values = [], []
    start = 0
    for i in range(len(prefix_sum)):
        end = int(prefix_sum[i])
        seg = q[start:end]
        a = int(np.argmax(seg))
        actions.append(a)
        values.append(seg[a])
        start = end
    return np.array(actions, np.int64), np.array(values, np.float32)


# ----------------------------------------------------------------------------
class NStepQNetPallas:
    """JAX/Pallas port of NStepQNet: num_steps Q-heads sharing one GCN (s2v)."""

    def __init__(self, key, num_steps):
        self.num_steps = num_steps
        (self.gcn_dev, self.gcn_raw,
         self.heads_dev, self.heads_raw) = init_nstep_qnet_params(key, num_steps)
        self._fwd_cache = {}
        self._batch = None
        self._fwd = None
        self._cfg = None

    def prepare_batch(self, adj, pool, rep, tile_override=None, force_tiled=False):
        """Build + cache device-side padded adjacency / pool / rep once per batch."""
        adj = np.asarray(adj, np.float32)
        pool = np.asarray(pool, np.float32)
        rep = np.asarray(rep, np.float32)
        n, b = adj.shape[0], pool.shape[0]
        cap = _vmem_capacity_bytes()
        n128 = _round_up(n, LANE)

        fused = (not force_tiled) and (_fused_need_bytes(n128) <= cap // 2)
        if fused:
            tile, n_c_pad = n128, n128
        else:
            tile, n_c_pad = _pick_tile(n128, cap)
            if tile_override is not None:
                tile = int(tile_override)
                assert tile % LANE == 0
                n_c_pad = _round_up(n128, tile)

        # padded nodes are isolated (zero adjacency rows/cols, zero pool/rep).
        adj_dev = jnp.zeros((n128, n_c_pad), jnp.bfloat16).at[:n, :n].set(
            jnp.asarray(adj, jnp.bfloat16))                 # PCIe transfer in bf16
        batch = {"adj": adj_dev}
        if fused:
            batch["poolT"] = jnp.zeros((n128, b), jnp.float32).at[:n, :].set(
                jnp.asarray(pool.T))
            batch["repT"] = jnp.zeros((b, n128), jnp.float32).at[:, :n].set(
                jnp.asarray(rep.T))
        else:
            pool_r = jnp.zeros((b, n128), jnp.float32).at[:, :n].set(
                jnp.asarray(pool))
            batch["adjpoolT"] = jnp.transpose(
                jnp.dot(pool_r, adj_dev.astype(jnp.float32), precision=HI))
            batch["repT"] = jnp.zeros((b, n_c_pad), jnp.float32).at[:, :n].set(
                jnp.asarray(rep.T))

        cfg = (n, b, n128, n_c_pad, tile, fused, cap)
        if cfg not in self._fwd_cache:
            self._fwd_cache[cfg] = _build_forward(*cfg)
        self._batch, self._fwd, self._cfg = batch, self._fwd_cache[cfg], cfg
        return cfg

    def forward(self, time_t, x, prefix_sum, banned_list=None, greedy_acts=False):
        assert 0 <= time_t < self.num_steps
        assert self._fwd is not None, "call prepare_batch(adj, pool, rep) first"
        raw_pred = self._fwd(jnp.asarray(x, jnp.float32), self._batch,
                             self.gcn_dev, self.heads_dev[time_t])
        actions = None
        if greedy_acts:
            actions, _ = greedy_actions_np(np.asarray(raw_pred),
                                           prefix_sum, banned_list)
        return actions, raw_pred, prefix_sum


# ----------------------------------------------------------------------------
if __name__ == "__main__":
    key = jax.random.PRNGKey(0)
    k_params, k_feat1, k_feat2 = jax.random.split(key, 3)

    net = NStepQNetPallas(k_params, num_steps=3)

    # ---- test 1: tiny batch (5-node cycle + triangle) -> fused single kernel
    graph_edges = [
        [(0, 1), (1, 2), (2, 3), (3, 4), (0, 4)],
        [(0, 1), (1, 2), (0, 2)],
    ]
    graph_sizes = [5, 3]
    adj, pool, rep, prefix_sum = build_batch(graph_edges, graph_sizes)
    n_total = adj.shape[0]
    x = jax.random.uniform(k_feat1, (n_total, GCN_IN), jnp.float32, 0.5, 1.0)

    net.prepare_batch(adj, pool, rep)
    actions, raw_pred, _ = net.forward(1, x, prefix_sum, greedy_acts=True)
    raw_pred = np.asarray(jax.block_until_ready(raw_pred))
    assert raw_pred.shape == (n_total, 1) and np.all(np.isfinite(raw_pred))
    ref = reference_forward(adj, np.asarray(x), pool, rep,
                            net.gcn_raw, net.heads_raw[1])
    np.testing.assert_allclose(raw_pred, ref, rtol=2e-2, atol=2e-2)
    assert actions.shape == (len(graph_sizes),)

    # ---- test 2: larger batch, forced two-pass tiled pipeline (grid > 1)
    graph_edges2 = [
        [(i, i + 1) for i in range(99)],    # 100-node path
        [(i, i + 1) for i in range(75)],    # 76-node path
    ]
    graph_sizes2 = [100, 76]
    adj2, pool2, rep2, prefix_sum2 = build_batch(graph_edges2, graph_sizes2)
    n_total2 = adj2.shape[0]
    x2 = jax.random.uniform(k_feat2, (n_total2, GCN_IN), jnp.float32, 0.5, 1.0)

    net.prepare_batch(adj2, pool2, rep2, force_tiled=True, tile_override=128)
    actions2, raw_pred2, _ = net.forward(0, x2, prefix_sum2, greedy_acts=True)
    raw_pred2 = np.asarray(jax.block_until_ready(raw_pred2))
    assert raw_pred2.shape == (n_total2, 1) and np.all(np.isfinite(raw_pred2))
    ref2 = reference_forward(adj2, np.asarray(x2), pool2, rep2,
                             net.gcn_raw, net.heads_raw[0])
    np.testing.assert_allclose(raw_pred2, ref2, rtol=2e-2, atol=2e-2)
    assert actions2.shape == (len(graph_sizes2),)

    print("KERNEL_OK")
</pallas_src>

<mosaic_0001>
module attributes {stable_mosaic.version = 11 : i64} {
  func.func @_fused_kernel(%arg0: i32, %arg1: memref<1xf32, #tpu.memory_space<smem>>, %arg2: memref<1xf32, #tpu.memory_space<smem>>, %arg3: memref<32xf32, #tpu.memory_space<smem>>, %arg4: memref<32xf32, #tpu.memory_space<smem>>, %arg5: memref<32xf32, #tpu.memory_space<smem>>, %arg6: memref<32xf32, #tpu.memory_space<smem>>, %arg7: memref<1x128xbf16, #tpu.memory_space<vmem>>, %arg8: memref<128x128xbf16, #tpu.memory_space<vmem>>, %arg9: memref<128x2xf32, #tpu.memory_space<vmem>>, %arg10: memref<2x128xf32, #tpu.memory_space<vmem>>, %arg11: memref<1x128xf32, #tpu.memory_space<vmem>>) attributes {dimension_semantics = [#tpu.dimension_semantics<arbitrary>], iteration_bounds = array<i64: 1>, scalar_prefetch = 0 : i64, scratch_operands = 0 : i64, tpu.core_type = #tpu.core_type<tc>, window_params = [{transform_indices = @transform_0, window_bounds = array<i64: 1>}, {transform_indices = @transform_1, window_bounds = array<i64: 1>}, {transform_indices = @transform_2, window_bounds = array<i64: 32>}, {transform_indices = @transform_3, window_bounds = array<i64: 32>}, {transform_indices = @transform_4, window_bounds = array<i64: 32>}, {transform_indices = @transform_5, window_bounds = array<i64: 32>}, {pipeline_mode = #tpu.pipeline_mode<synchronous>, transform_indices = @transform_6, window_bounds = array<i64: 1, 128>}, {pipeline_mode = #tpu.pipeline_mode<synchronous>, transform_indices = @transform_7, window_bounds = array<i64: 128, 128>}, {pipeline_mode = #tpu.pipeline_mode<synchronous>, transform_indices = @transform_8, window_bounds = array<i64: 128, 2>}, {pipeline_mode = #tpu.pipeline_mode<synchronous>, transform_indices = @transform_9, window_bounds = array<i64: 2, 128>}, {pipeline_mode = #tpu.pipeline_mode<synchronous>, transform_indices = @transform_10, window_bounds = array<i64: 1, 128>}]} {
    %c0 = arith.constant 0 : index
    %c0_0 = arith.constant 0 : index
    %0 = vector.load %arg8[%c0, %c0_0] : memref<128x128xbf16, #tpu.memory_space<vmem>>, vector<128x128xbf16>
    %c0_1 = arith.constant 0 : index
    %c0_2 = arith.constant 0 : index
    %1 = vector.load %arg7[%c0_1, %c0_2] : memref<1x128xbf16, #tpu.memory_space<vmem>>, vector<1x128xbf16>
    %cst = arith.constant dense<0.000000e+00> : vector<1x128xf32>
    %2 = tpu.matmul %1, %0, %cst {dimension_numbers = #tpu.dot_dimension_numbers<[1], [0], [0], [1], [0, 0, 1, 1], [], []>} : vector<1x128xbf16>, vector<128x128xbf16>, vector<1x128xf32> -> vector<1x128xf32>
    %c0_3 = arith.constant 0 : index
    %3 = memref.load %arg1[%c0_3] : memref<1xf32, #tpu.memory_space<smem>>
    %4 = vector.broadcast %3 : f32 to vector<1x128xf32>
    %5 = arith.addf %2, %4 : vector<1x128xf32>
    %cst_4 = arith.constant 0.000000e+00 : f32
    %6 = vector.broadcast %cst_4 : f32 to vector<1x128xf32>
    %7 = arith.maximumf %5, %6 : vector<1x128xf32>
    %8 = arith.truncf %7 : vector<1x128xf32> to vector<1x128xbf16>
    %cst_5 = arith.constant dense<0.000000e+00> : vector<1x128xf32>
    %9 = tpu.matmul %8, %0, %cst_5 {dimension_numbers = #tpu.dot_dimension_numbers<[1], [0], [0], [1], [0, 0, 1, 1], [], []>} : vector<1x128xbf16>, vector<128x128xbf16>, vector<1x128xf32> -> vector<1x128xf32>
    %c0_6 = arith.constant 0 : index
    %c0_7 = arith.constant 0 : index
    %10 = vector.load %arg9[%c0_6, %c0_7] : memref<128x2xf32, #tpu.memory_space<vmem>>, vector<128x2xf32>
    %cst_8 = arith.constant dense<0.000000e+00> : vector<1x2xf32>
    %11 = tpu.matmul %9, %10, %cst_8 {dimension_numbers = #tpu.dot_dimension_numbers<[1], [0], [0], [1], [0, 0, 1, 1], [], []>} : vector<1x128xf32>, vector<128x2xf32>, vector<1x2xf32> -> vector<1x2xf32>
    %c0_9 = arith.constant 0 : index
    %c0_10 = arith.constant 0 : index
    %12 = vector.load %arg10[%c0_9, %c0_10] : memref<2x128xf32, #tpu.memory_space<vmem>>, vector<2x128xf32>
    %cst_11 = arith.constant dense<0.000000e+00> : vector<1x128xf32>
    %13 = tpu.matmul %11, %12, %cst_11 {dimension_numbers = #tpu.dot_dimension_numbers<[1], [0], [0], [1], [0, 0, 1, 1], [], []>} : vector<1x2xf32>, vector<2x128xf32>, vector<1x128xf32> -> vector<1x128xf32>
    %cst_12 = arith.constant 0.000000e+00 : f32
    %14 = vector.broadcast %cst_12 : f32 to vector<1x128xf32>
    %c0_13 = arith.constant 0 : index
    %15 = memref.load %arg3[%c0_13] : memref<32xf32, #tpu.memory_space<smem>>
    %16 = vector.broadcast %15 : f32 to vector<1x128xf32>
    %17 = arith.mulf %16, %9 : vector<1x128xf32>
    %c0_14 = arith.constant 0 : index
    %18 = memref.load %arg4[%c0_14] : memref<32xf32, #tpu.memory_space<smem>>
    %19 = vector.broadcast %18 : f32 to vector<1x128xf32>
    %20 = arith.mulf %19, %13 : vector<1x128xf32>
    %21 = arith.addf %17, %20 : vector<1x128xf32>
    %c0_15 = arith.constant 0 : index
    %22 = memref.load %arg5[%c0_15] : memref<32xf32, #tpu.memory_space<smem>>
    %23 = vector.broadcast %22 : f32 to vector<1x128xf32>
    %24 = arith.addf %21, %23 : vector<1x128xf32>
    %cst_16 = arith.constant 0.000000e+00 : f32
    %25 = vector.broadcast %cst_16 : f32 to vector<1x128xf32>
    %26 = arith.maximumf %24, %25 : vector<1x128xf32>
    %c0_17 = arith.constant 0 : index
    %27 = memref.load %arg6[%c0_17] : memref<32xf32, #tpu.memory_space<smem>>
    %28 = vector.broadcast %27 : f32 to vector<1x128xf32>
    %29 = arith.mulf %28, %26 : vector<1x128xf32>
    %30 = arith.addf %14, %29 : vector<1x128xf32>
    %c1 = arith.constant 1 : index
    %31 = memref.load %arg3[%c1] : memref<32xf32, #tpu.memory_space<smem>>
    %32 = vector.broadcast %31 : f32 to vector<1x128xf32>
    %33 = arith.mulf %32, %9 : vector<1x128xf32>
    %c1_18 = arith.constant 1 : index
    %34 = memref.load %arg4[%c1_18] : memref<32xf32, #tpu.memory_space<smem>>
    %35 = vector.broadcast %34 : f32 to vector<1x128xf32>
    %36 = arith.mulf %35, %13 : vector<1x128xf32>
    %37 = arith.addf %33, %36 : vector<1x128xf32>
    %c1_19 = arith.constant 1 : index
    %38 = memref.load %arg5[%c1_19] : memref<32xf32, #tpu.memory_space<smem>>
    %39 = vector.broadcast %38 : f32 to vector<1x128xf32>
    %40 = arith.addf %37, %39 : vector<1x128xf32>
    %cst_20 = arith.constant 0.000000e+00 : f32
    %41 = vector.broadcast %cst_20 : f32 to vector<1x128xf32>
    %42 = arith.maximumf %40, %41 : vector<1x128xf32>
    %c1_21 = arith.constant 1 : index
    %43 = memref.load %arg6[%c1_21] : memref<32xf32, #tpu.memory_space<smem>>
    %44 = vector.broadcast %43 : f32 to vector<1x128xf32>
    %45 = arith.mulf %44, %42 : vector<1x128xf32>
    %46 = arith.addf %30, %45 : vector<1x128xf32>
    %c2 = arith.constant 2 : index
    %47 = memref.load %arg3[%c2] : memref<32xf32, #tpu.memory_space<smem>>
    %48 = vector.broadcast %47 : f32 to vector<1x128xf32>
    %49 = arith.mulf %48, %9 : vector<1x128xf32>
    %c2_22 = arith.constant 2 : index
    %50 = memref.load %arg4[%c2_22] : memref<32xf32, #tpu.memory_space<smem>>
    %51 = vector.broadcast %50 : f32 to vector<1x128xf32>
    %52 = arith.mulf %51, %13 : vector<1x128xf32>
    %53 = arith.addf %49, %52 : vector<1x128xf32>
    %c2_23 = arith.constant 2 : index
    %54 = memref.load %arg5[%c2_23] : memref<32xf32, #tpu.memory_space<smem>>
    %55 = vector.broadcast %54 : f32 to vector<1x128xf32>
    %56 = arith.addf %53, %55 : vector<1x128xf32>
    %cst_24 = arith.constant 0.000000e+00 : f32
    %57 = vector.broadcast %cst_24 : f32 to vector<1x128xf32>
    %58 = arith.maximumf %56, %57 : vector<1x128xf32>
    %c2_25 = arith.constant 2 : index
    %59 = memref.load %arg6[%c2_25] : memref<32xf32, #tpu.memory_space<smem>>
    %60 = vector.broadcast %59 : f32 to vector<1x128xf32>
    %61 = arith.mulf %60, %58 : vector<1x128xf32>
    %62 = arith.addf %46, %61 : vector<1x128xf32>
    %c3 = arith.constant 3 : index
    %63 = memref.load %arg3[%c3] : memref<32xf32, #tpu.memory_space<smem>>
    %64 = vector.broadcast %63 : f32 to vector<1x128xf32>
    %65 = arith.mulf %64, %9 : vector<1x128xf32>
    %c3_26 = arith.constant 3 : index
    %66 = memref.load %arg4[%c3_26] : memref<32xf32, #tpu.memory_space<smem>>
    %67 = vector.broadcast %66 : f32 to vector<1x128xf32>
    %68 = arith.mulf %67, %13 : vector<1x128xf32>
    %69 = arith.addf %65, %68 : vector<1x128xf32>
    %c3_27 = arith.constant 3 : index
    %70 = memref.load %arg5[%c3_27] : memref<32xf32, #tpu.memory_space<smem>>
    %71 = vector.broadcast %70 : f32 to vector<1x128xf32>
    %72 = arith.addf %69, %71 : vector<1x128xf32>
    %cst_28 = arith.constant 0.000000e+00 : f32
    %73 = vector.broadcast %cst_28 : f32 to vector<1x128xf32>
    %74 = arith.maximumf %72, %73 : vector<1x128xf32>
    %c3_29 = arith.constant 3 : index
    %75 = memref.load %arg6[%c3_29] : memref<32xf32, #tpu.memory_space<smem>>
    %76 = vector.broadcast %75 : f32 to vector<1x128xf32>
    %77 = arith.mulf %76, %74 : vector<1x128xf32>
    %78 = arith.addf %62, %77 : vector<1x128xf32>
    %c4 = arith.constant 4 : index
    %79 = memref.load %arg3[%c4] : memref<32xf32, #tpu.memory_space<smem>>
    %80 = vector.broadcast %79 : f32 to vector<1x128xf32>
    %81 = arith.mulf %80, %9 : vector<1x128xf32>
    %c4_30 = arith.constant 4 : index
    %82 = memref.load %arg4[%c4_30] : memref<32xf32, #tpu.memory_space<smem>>
    %83 = vector.broadcast %82 : f32 to vector<1x128xf32>
    %84 = arith.mulf %83, %13 : vector<1x128xf32>
    %85 = arith.addf %81, %84 : vector<1x128xf32>
    %c4_31 = arith.constant 4 : index
    %86 = memref.load %arg5[%c4_31] : memref<32xf32, #tpu.memory_space<smem>>
    %87 = vector.broadcast %86 : f32 to vector<1x128xf32>
    %88 = arith.addf %85, %87 : vector<1x128xf32>
    %cst_32 = arith.constant 0.000000e+00 : f32
    %89 = vector.broadcast %cst_32 : f32 to vector<1x128xf32>
    %90 = arith.maximumf %88, %89 : vector<1x128xf32>
    %c4_33 = arith.constant 4 : index
    %91 = memref.load %arg6[%c4_33] : memref<32xf32, #tpu.memory_space<smem>>
    %92 = vector.broadcast %91 : f32 to vector<1x128xf32>
    %93 = arith.mulf %92, %90 : vector<1x128xf32>
    %94 = arith.addf %78, %93 : vector<1x128xf32>
    %c5 = arith.constant 5 : index
    %95 = memref.load %arg3[%c5] : memref<32xf32, #tpu.memory_space<smem>>
    %96 = vector.broadcast %95 : f32 to vector<1x128xf32>
    %97 = arith.mulf %96, %9 : vector<1x128xf32>
    %c5_34 = arith.constant 5 : index
    %98 = memref.load %arg4[%c5_34] : memref<32xf32, #tpu.memory_space<smem>>
    %99 = vector.broadcast %98 : f32 to vector<1x128xf32>
    %100 = arith.mulf %99, %13 : vector<1x128xf32>
    %101 = arith.addf %97, %100 : vector<1x128xf32>
    %c5_35 = arith.constant 5 : index
    %102 = memref.load %arg5[%c5_35] : memref<32xf32, #tpu.memory_space<smem>>
    %103 = vector.broadcast %102 : f32 to vector<1x128xf32>
    %104 = arith.addf %101, %103 : vector<1x128xf32>
    %cst_36 = arith.constant 0.000000e+00 : f32
    %105 = vector.broadcast %cst_36 : f32 to vector<1x128xf32>
    %106 = arith.maximumf %104, %105 : vector<1x128xf32>
    %c5_37 = arith.constant 5 : index
    %107 = memref.load %arg6[%c5_37] : memref<32xf32, #tpu.memory_space<smem>>
    %108 = vector.broadcast %107 : f32 to vector<1x128xf32>
    %109 = arith.mulf %108, %106 : vector<1x128xf32>
    %110 = arith.addf %94, %109 : vector<1x128xf32>
    %c6 = arith.constant 6 : index
    %111 = memref.load %arg3[%c6] : memref<32xf32, #tpu.memory_space<smem>>
    %112 = vector.broadcast %111 : f32 to vector<1x128xf32>
    %113 = arith.mulf %112, %9 : vector<1x128xf32>
    %c6_38 = arith.constant 6 : index
    %114 = memref.load %arg4[%c6_38] : memref<32xf32, #tpu.memory_space<smem>>
    %115 = vector.broadcast %114 : f32 to vector<1x128xf32>
    %116 = arith.mulf %115, %13 : vector<1x128xf32>
    %117 = arith.addf %113, %116 : vector<1x128xf32>
    %c6_39 = arith.constant 6 : index
    %118 = memref.load %arg5[%c6_39] : memref<32xf32, #tpu.memory_space<smem>>
    %119 = vector.broadcast %118 : f32 to vector<1x128xf32>
    %120 = arith.addf %117, %119 : vector<1x128xf32>
    %cst_40 = arith.constant 0.000000e+00 : f32
    %121 = vector.broadcast %cst_40 : f32 to vector<1x128xf32>
    %122 = arith.maximumf %120, %121 : vector<1x128xf32>
    %c6_41 = arith.constant 6 : index
    %123 = memref.load %arg6[%c6_41] : memref<32xf32, #tpu.memory_space<smem>>
    %124 = vector.broadcast %123 : f32 to vector<1x128xf32>
    %125 = arith.mulf %124, %122 : vector<1x128xf32>
    %126 = arith.addf %110, %125 : vector<1x128xf32>
    %c7 = arith.constant 7 : index
    %127 = memref.load %arg3[%c7] : memref<32xf32, #tpu.memory_space<smem>>
    %128 = vector.broadcast %127 : f32 to vector<1x128xf32>
    %129 = arith.mulf %128, %9 : vector<1x128xf32>
    %c7_42 = arith.constant 7 : index
    %130 = memref.load %arg4[%c7_42] : memref<32xf32, #tpu.memory_space<smem>>
    %131 = vector.broadcast %130 : f32 to vector<1x128xf32>
    %132 = arith.mulf %131, %13 : vector<1x128xf32>
    %133 = arith.addf %129, %132 : vector<1x128xf32>
    %c7_43 = arith.constant 7 : index
    %134 = memref.load %arg5[%c7_43] : memref<32xf32, #tpu.memory_space<smem>>
    %135 = vector.broadcast %134 : f32 to vector<1x128xf32>
    %136 = arith.addf %133, %135 : vector<1x128xf32>
    %cst_44 = arith.constant 0.000000e+00 : f32
    %137 = vector.broadcast %cst_44 : f32 to vector<1x128xf32>
    %138 = arith.maximumf %136, %137 : vector<1x128xf32>
    %c7_45 = arith.constant 7 : index
    %139 = memref.load %arg6[%c7_45] : memref<32xf32, #tpu.memory_space<smem>>
    %140 = vector.broadcast %139 : f32 to vector<1x128xf32>
    %141 = arith.mulf %140, %138 : vector<1x128xf32>
    %142 = arith.addf %126, %141 : vector<1x128xf32>
    %c8 = arith.constant 8 : index
    %143 = memref.load %arg3[%c8] : memref<32xf32, #tpu.memory_space<smem>>
    %144 = vector.broadcast %143 : f32 to vector<1x128xf32>
    %145 = arith.mulf %144, %9 : vector<1x128xf32>
    %c8_46 = arith.constant 8 : index
    %146 = memref.load %arg4[%c8_46] : memref<32xf32, #tpu.memory_space<smem>>
    %147 = vector.broadcast %146 : f32 to vector<1x128xf32>
    %148 = arith.mulf %147, %13 : vector<1x128xf32>
    %149 = arith.addf %145, %148 : vector<1x128xf32>
    %c8_47 = arith.constant 8 : index
    %150 = memref.load %arg5[%c8_47] : memref<32xf32, #tpu.memory_space<smem>>
    %151 = vector.broadcast %150 : f32 to vector<1x128xf32>
    %152 = arith.addf %149, %151 : vector<1x128xf32>
    %cst_48 = arith.constant 0.000000e+00 : f32
    %153 = vector.broadcast %cst_48 : f32 to vector<1x128xf32>
    %154 = arith.maximumf %152, %153 : vector<1x128xf32>
    %c8_49 = arith.constant 8 : index
    %155 = memref.load %arg6[%c8_49] : memref<32xf32, #tpu.memory_space<smem>>
    %156 = vector.broadcast %155 : f32 to vector<1x128xf32>
    %157 = arith.mulf %156, %154 : vector<1x128xf32>
    %158 = arith.addf %142, %157 : vector<1x128xf32>
    %c9 = arith.constant 9 : index
    %159 = memref.load %arg3[%c9] : memref<32xf32, #tpu.memory_space<smem>>
    %160 = vector.broadcast %159 : f32 to vector<1x128xf32>
    %161 = arith.mulf %160, %9 : vector<1x128xf32>
    %c9_50 = arith.constant 9 : index
    %162 = memref.load %arg4[%c9_50] : memref<32xf32, #tpu.memory_space<smem>>
    %163 = vector.broadcast %162 : f32 to vector<1x128xf32>
    %164 = arith.mulf %163, %13 : vector<1x128xf32>
    %165 = arith.addf %161, %164 : vector<1x128xf32>
    %c9_51 = arith.constant 9 : index
    %166 = memref.load %arg5[%c9_51] : memref<32xf32, #tpu.memory_space<smem>>
    %167 = vector.broadcast %166 : f32 to vector<1x128xf32>
    %168 = arith.addf %165, %167 : vector<1x128xf32>
    %cst_52 = arith.constant 0.000000e+00 : f32
    %169 = vector.broadcast %cst_52 : f32 to vector<1x128xf32>
    %170 = arith.maximumf %168, %169 : vector<1x128xf32>
    %c9_53 = arith.constant 9 : index
    %171 = memref.load %arg6[%c9_53] : memref<32xf32, #tpu.memory_space<smem>>
    %172 = vector.broadcast %171 : f32 to vector<1x128xf32>
    %173 = arith.mulf %172, %170 : vector<1x128xf32>
    %174 = arith.addf %158, %173 : vector<1x128xf32>
    %c10 = arith.constant 10 : index
    %175 = memref.load %arg3[%c10] : memref<32xf32, #tpu.memory_space<smem>>
    %176 = vector.broadcast %175 : f32 to vector<1x128xf32>
    %177 = arith.mulf %176, %9 : vector<1x128xf32>
    %c10_54 = arith.constant 10 : index
    %178 = memref.load %arg4[%c10_54] : memref<32xf32, #tpu.memory_space<smem>>
    %179 = vector.broadcast %178 : f32 to vector<1x128xf32>
    %180 = arith.mulf %179, %13 : vector<1x128xf32>
    %181 = arith.addf %177, %180 : vector<1x128xf32>
    %c10_55 = arith.constant 10 : index
    %182 = memref.load %arg5[%c10_55] : memref<32xf32, #tpu.memory_space<smem>>
    %183 = vector.broadcast %182 : f32 to vector<1x128xf32>
    %184 = arith.addf %181, %183 : vector<1x128xf32>
    %cst_56 = arith.constant 0.000000e+00 : f32
    %185 = vector.broadcast %cst_56 : f32 to vector<1x128xf32>
    %186 = arith.maximumf %184, %185 : vector<1x128xf32>
    %c10_57 = arith.constant 10 : index
    %187 = memref.load %arg6[%c10_57] : memref<32xf32, #tpu.memory_space<smem>>
    %188 = vector.broadcast %187 : f32 to vector<1x128xf32>
    %189 = arith.mulf %188, %186 : vector<1x128xf32>
    %190 = arith.addf %174, %189 : vector<1x128xf32>
    %c11 = arith.constant 11 : index
    %191 = memref.load %arg3[%c11] : memref<32xf32, #tpu.memory_space<smem>>
    %192 = vector.broadcast %191 : f32 to vector<1x128xf32>
    %193 = arith.mulf %192, %9 : vector<1x128xf32>
    %c11_58 = arith.constant 11 : index
    %194 = memref.load %arg4[%c11_58] : memref<32xf32, #tpu.memory_space<smem>>
    %195 = vector.broadcast %194 : f32 to vector<1x128xf32>
    %196 = arith.mulf %195, %13 : vector<1x128xf32>
    %197 = arith.addf %193, %196 : vector<1x128xf32>
    %c11_59 = arith.constant 11 : index
    %198 = memref.load %arg5[%c11_59] : memref<32xf32, #tpu.memory_space<smem>>
    %199 = vector.broadcast %198 : f32 to vector<1x128xf32>
    %200 = arith.addf %197, %199 : vector<1x128xf32>
    %cst_60 = arith.constant 0.000000e+00 : f32
    %201 = vector.broadcast %cst_60 : f32 to vector<1x128xf32>
    %202 = arith.maximumf %200, %201 : vector<1x128xf32>
    %c11_61 = arith.constant 11 : index
    %203 = memref.load %arg6[%c11_61] : memref<32xf32, #tpu.memory_space<smem>>
    %204 = vector.broadcast %203 : f32 to vector<1x128xf32>
    %205 = arith.mulf %204, %202 : vector<1x128xf32>
    %206 = arith.addf %190, %205 : vector<1x128xf32>
    %c12 = arith.constant 12 : index
    %207 = memref.load %arg3[%c12] : memref<32xf32, #tpu.memory_space<smem>>
    %208 = vector.broadcast %207 : f32 to vector<1x128xf32>
    %209 = arith.mulf %208, %9 : vector<1x128xf32>
    %c12_62 = arith.constant 12 : index
    %210 = memref.load %arg4[%c12_62] : memref<32xf32, #tpu.memory_space<smem>>
    %211 = vector.broadcast %210 : f32 to vector<1x128xf32>
    %212 = arith.mulf %211, %13 : vector<1x128xf32>
    %213 = arith.addf %209, %212 : vector<1x128xf32>
    %c12_63 = arith.constant 12 : index
    %214 = memref.load %arg5[%c12_63] : memref<32xf32, #tpu.memory_space<smem>>
    %215 = vector.broadcast %214 : f32 to vector<1x128xf32>
    %216 = arith.addf %213, %215 : vector<1x128xf32>
    %cst_64 = arith.constant 0.000000e+00 : f32
    %217 = vector.broadcast %cst_64 : f32 to vector<1x128xf32>
    %218 = arith.maximumf %216, %217 : vector<1x128xf32>
    %c12_65 = arith.constant 12 : index
    %219 = memref.load %arg6[%c12_65] : memref<32xf32, #tpu.memory_space<smem>>
    %220 = vector.broadcast %219 : f32 to vector<1x128xf32>
    %221 = arith.mulf %220, %218 : vector<1x128xf32>
    %222 = arith.addf %206, %221 : vector<1x128xf32>
    %c13 = arith.constant 13 : index
    %223 = memref.load %arg3[%c13] : memref<32xf32, #tpu.memory_space<smem>>
    %224 = vector.broadcast %223 : f32 to vector<1x128xf32>
    %225 = arith.mulf %224, %9 : vector<1x128xf32>
    %c13_66 = arith.constant 13 : index
    %226 = memref.load %arg4[%c13_66] : memref<32xf32, #tpu.memory_space<smem>>
    %227 = vector.broadcast %226 : f32 to vector<1x128xf32>
    %228 = arith.mulf %227, %13 : vector<1x128xf32>
    %229 = arith.addf %225, %228 : vector<1x128xf32>
    %c13_67 = arith.constant 13 : index
    %230 = memref.load %arg5[%c13_67] : memref<32xf32, #tpu.memory_space<smem>>
    %231 = vector.broadcast %230 : f32 to vector<1x128xf32>
    %232 = arith.addf %229, %231 : vector<1x128xf32>
    %cst_68 = arith.constant 0.000000e+00 : f32
    %233 = vector.broadcast %cst_68 : f32 to vector<1x128xf32>
    %234 = arith.maximumf %232, %233 : vector<1x128xf32>
    %c13_69 = arith.constant 13 : index
    %235 = memref.load %arg6[%c13_69] : memref<32xf32, #tpu.memory_space<smem>>
    %236 = vector.broadcast %235 : f32 to vector<1x128xf32>
    %237 = arith.mulf %236, %234 : vector<1x128xf32>
    %238 = arith.addf %222, %237 : vector<1x128xf32>
    %c14 = arith.constant 14 : index
    %239 = memref.load %arg3[%c14] : memref<32xf32, #tpu.memory_space<smem>>
    %240 = vector.broadcast %239 : f32 to vector<1x128xf32>
    %241 = arith.mulf %240, %9 : vector<1x128xf32>
    %c14_70 = arith.constant 14 : index
    %242 = memref.load %arg4[%c14_70] : memref<32xf32, #tpu.memory_space<smem>>
    %243 = vector.broadcast %242 : f32 to vector<1x128xf32>
    %244 = arith.mulf %243, %13 : vector<1x128xf32>
    %245 = arith.addf %241, %244 : vector<1x128xf32>
    %c14_71 = arith.constant 14 : index
    %246 = memref.load %arg5[%c14_71] : memref<32xf32, #tpu.memory_space<smem>>
    %247 = vector.broadcast %246 : f32 to vector<1x128xf32>
    %248 = arith.addf %245, %247 : vector<1x128xf32>
    %cst_72 = arith.constant 0.000000e+00 : f32
    %249 = vector.broadcast %cst_72 : f32 to vector<1x128xf32>
    %250 = arith.maximumf %248, %249 : vector<1x128xf32>
    %c14_73 = arith.constant 14 : index
    %251 = memref.load %arg6[%c14_73] : memref<32xf32, #tpu.memory_space<smem>>
    %252 = vector.broadcast %251 : f32 to vector<1x128xf32>
    %253 = arith.mulf %252, %250 : vector<1x128xf32>
    %254 = arith.addf %238, %253 : vector<1x128xf32>
    %c15 = arith.constant 15 : index
    %255 = memref.load %arg3[%c15] : memref<32xf32, #tpu.memory_space<smem>>
    %256 = vector.broadcast %255 : f32 to vector<1x128xf32>
    %257 = arith.mulf %256, %9 : vector<1x128xf32>
    %c15_74 = arith.constant 15 : index
    %258 = memref.load %arg4[%c15_74] : memref<32xf32, #tpu.memory_space<smem>>
    %259 = vector.broadcast %258 : f32 to vector<1x128xf32>
    %260 = arith.mulf %259, %13 : vector<1x128xf32>
    %261 = arith.addf %257, %260 : vector<1x128xf32>
    %c15_75 = arith.constant 15 : index
    %262 = memref.load %arg5[%c15_75] : memref<32xf32, #tpu.memory_space<smem>>
    %263 = vector.broadcast %262 : f32 to vector<1x128xf32>
    %264 = arith.addf %261, %263 : vector<1x128xf32>
    %cst_76 = arith.constant 0.000000e+00 : f32
    %265 = vector.broadcast %cst_76 : f32 to vector<1x128xf32>
    %266 = arith.maximumf %264, %265 : vector<1x128xf32>
    %c15_77 = arith.constant 15 : index
    %267 = memref.load %arg6[%c15_77] : memref<32xf32, #tpu.memory_space<smem>>
    %268 = vector.broadcast %267 : f32 to vector<1x128xf32>
    %269 = arith.mulf %268, %266 : vector<1x128xf32>
    %270 = arith.addf %254, %269 : vector<1x128xf32>
    %c16 = arith.constant 16 : index
    %271 = memref.load %arg3[%c16] : memref<32xf32, #tpu.memory_space<smem>>
    %272 = vector.broadcast %271 : f32 to vector<1x128xf32>
    %273 = arith.mulf %272, %9 : vector<1x128xf32>
    %c16_78 = arith.constant 16 : index
    %274 = memref.load %arg4[%c16_78] : memref<32xf32, #tpu.memory_space<smem>>
    %275 = vector.broadcast %274 : f32 to vector<1x128xf32>
    %276 = arith.mulf %275, %13 : vector<1x128xf32>
    %277 = arith.addf %273, %276 : vector<1x128xf32>
    %c16_79 = arith.constant 16 : index
    %278 = memref.load %arg5[%c16_79] : memref<32xf32, #tpu.memory_space<smem>>
    %279 = vector.broadcast %278 : f32 to vector<1x128xf32>
    %280 = arith.addf %277, %279 : vector<1x128xf32>
    %cst_80 = arith.constant 0.000000e+00 : f32
    %281 = vector.broadcast %cst_80 : f32 to vector<1x128xf32>
    %282 = arith.maximumf %280, %281 : vector<1x128xf32>
    %c16_81 = arith.constant 16 : index
    %283 = memref.load %arg6[%c16_81] : memref<32xf32, #tpu.memory_space<smem>>
    %284 = vector.broadcast %283 : f32 to vector<1x128xf32>
    %285 = arith.mulf %284, %282 : vector<1x128xf32>
    %286 = arith.addf %270, %285 : vector<1x128xf32>
    %c17 = arith.constant 17 : index
    %287 = memref.load %arg3[%c17] : memref<32xf32, #tpu.memory_space<smem>>
    %288 = vector.broadcast %287 : f32 to vector<1x128xf32>
    %289 = arith.mulf %288, %9 : vector<1x128xf32>
    %c17_82 = arith.constant 17 : index
    %290 = memref.load %arg4[%c17_82] : memref<32xf32, #tpu.memory_space<smem>>
    %291 = vector.broadcast %290 : f32 to vector<1x128xf32>
    %292 = arith.mulf %291, %13 : vector<1x128xf32>
    %293 = arith.addf %289, %292 : vector<1x128xf32>
    %c17_83 = arith.constant 17 : index
    %294 = memref.load %arg5[%c17_83] : memref<32xf32, #tpu.memory_space<smem>>
    %295 = vector.broadcast %294 : f32 to vector<1x128xf32>
    %296 = arith.addf %293, %295 : vector<1x128xf32>
    %cst_84 = arith.constant 0.000000e+00 : f32
    %297 = vector.broadcast %cst_84 : f32 to vector<1x128xf32>
    %298 = arith.maximumf %296, %297 : vector<1x128xf32>
    %c17_85 = arith.constant 17 : index
    %299 = memref.load %arg6[%c17_85] : memref<32xf32, #tpu.memory_space<smem>>
    %300 = vector.broadcast %299 : f32 to vector<1x128xf32>
    %301 = arith.mulf %300, %298 : vector<1x128xf32>
    %302 = arith.addf %286, %301 : vector<1x128xf32>
    %c18 = arith.constant 18 : index
    %303 = memref.load %arg3[%c18] : memref<32xf32, #tpu.memory_space<smem>>
    %304 = vector.broadcast %303 : f32 to vector<1x128xf32>
    %305 = arith.mulf %304, %9 : vector<1x128xf32>
    %c18_86 = arith.constant 18 : index
    %306 = memref.load %arg4[%c18_86] : memref<32xf32, #tpu.memory_space<smem>>
    %307 = vector.broadcast %306 : f32 to vector<1x128xf32>
    %308 = arith.mulf %307, %13 : vector<1x128xf32>
    %309 = arith.addf %305, %308 : vector<1x128xf32>
    %c18_87 = arith.constant 18 : index
    %310 = memref.load %arg5[%c18_87] : memref<32xf32, #tpu.memory_space<smem>>
    %311 = vector.broadcast %310 : f32 to vector<1x128xf32>
    %312 = arith.addf %309, %311 : vector<1x128xf32>
    %cst_88 = arith.constant 0.000000e+00 : f32
    %313 = vector.broadcast %cst_88 : f32 to vector<1x128xf32>
    %314 = arith.maximumf %312, %313 : vector<1x128xf32>
    %c18_89 = arith.constant 18 : index
    %315 = memref.load %arg6[%c18_89] : memref<32xf32, #tpu.memory_space<smem>>
    %316 = vector.broadcast %315 : f32 to vector<1x128xf32>
    %317 = arith.mulf %316, %314 : vector<1x128xf32>
    %318 = arith.addf %302, %317 : vector<1x128xf32>
    %c19 = arith.constant 19 : index
    %319 = memref.load %arg3[%c19] : memref<32xf32, #tpu.memory_space<smem>>
    %320 = vector.broadcast %319 : f32 to vector<1x128xf32>
    %321 = arith.mulf %320, %9 : vector<1x128xf32>
    %c19_90 = arith.constant 19 : index
    %322 = memref.load %arg4[%c19_90] : memref<32xf32, #tpu.memory_space<smem>>
    %323 = vector.broadcast %322 : f32 to vector<1x128xf32>
    %324 = arith.mulf %323, %13 : vector<1x128xf32>
    %325 = arith.addf %321, %324 : vector<1x128xf32>
    %c19_91 = arith.constant 19 : index
    %326 = memref.load %arg5[%c19_91] : memref<32xf32, #tpu.memory_space<smem>>
    %327 = vector.broadcast %326 : f32 to vector<1x128xf32>
    %328 = arith.addf %325, %327 : vector<1x128xf32>
    %cst_92 = arith.constant 0.000000e+00 : f32
    %329 = vector.broadcast %cst_92 : f32 to vector<1x128xf32>
    %330 = arith.maximumf %328, %329 : vector<1x128xf32>
    %c19_93 = arith.constant 19 : index
    %331 = memref.load %arg6[%c19_93] : memref<32xf32, #tpu.memory_space<smem>>
    %332 = vector.broadcast %331 : f32 to vector<1x128xf32>
    %333 = arith.mulf %332, %330 : vector<1x128xf32>
    %334 = arith.addf %318, %333 : vector<1x128xf32>
    %c20 = arith.constant 20 : index
    %335 = memref.load %arg3[%c20] : memref<32xf32, #tpu.memory_space<smem>>
    %336 = vector.broadcast %335 : f32 to vector<1x128xf32>
    %337 = arith.mulf %336, %9 : vector<1x128xf32>
    %c20_94 = arith.constant 20 : index
    %338 = memref.load %arg4[%c20_94] : memref<32xf32, #tpu.memory_space<smem>>
    %339 = vector.broadcast %338 : f32 to vector<1x128xf32>
    %340 = arith.mulf %339, %13 : vector<1x128xf32>
    %341 = arith.addf %337, %340 : vector<1x128xf32>
    %c20_95 = arith.constant 20 : index
    %342 = memref.load %arg5[%c20_95] : memref<32xf32, #tpu.memory_space<smem>>
    %343 = vector.broadcast %342 : f32 to vector<1x128xf32>
    %344 = arith.addf %341, %343 : vector<1x128xf32>
    %cst_96 = arith.constant 0.000000e+00 : f32
    %345 = vector.broadcast %cst_96 : f32 to vector<1x128xf32>
    %346 = arith.maximumf %344, %345 : vector<1x128xf32>
    %c20_97 = arith.constant 20 : index
    %347 = memref.load %arg6[%c20_97] : memref<32xf32, #tpu.memory_space<smem>>
    %348 = vector.broadcast %347 : f32 to vector<1x128xf32>
    %349 = arith.mulf %348, %346 : vector<1x128xf32>
    %350 = arith.addf %334, %349 : vector<1x128xf32>
    %c21 = arith.constant 21 : index
    %351 = memref.load %arg3[%c21] : memref<32xf32, #tpu.memory_space<smem>>
    %352 = vector.broadcast %351 : f32 to vector<1x128xf32>
    %353 = arith.mulf %352, %9 : vector<1x128xf32>
    %c21_98 = arith.constant 21 : index
    %354 = memref.load %arg4[%c21_98] : memref<32xf32, #tpu.memory_space<smem>>
    %355 = vector.broadcast %354 : f32 to vector<1x128xf32>
    %356 = arith.mulf %355, %13 : vector<1x128xf32>
    %357 = arith.addf %353, %356 : vector<1x128xf32>
    %c21_99 = arith.constant 21 : index
    %358 = memref.load %arg5[%c21_99] : memref<32xf32, #tpu.memory_space<smem>>
    %359 = vector.broadcast %358 : f32 to vector<1x128xf32>
    %360 = arith.addf %357, %359 : vector<1x128xf32>
    %cst_100 = arith.constant 0.000000e+00 : f32
    %361 = vector.broadcast %cst_100 : f32 to vector<1x128xf32>
    %362 = arith.maximumf %360, %361 : vector<1x128xf32>
    %c21_101 = arith.constant 21 : index
    %363 = memref.load %arg6[%c21_101] : memref<32xf32, #tpu.memory_space<smem>>
    %364 = vector.broadcast %363 : f32 to vector<1x128xf32>
    %365 = arith.mulf %364, %362 : vector<1x128xf32>
    %366 = arith.addf %350, %365 : vector<1x128xf32>
    %c22 = arith.constant 22 : index
    %367 = memref.load %arg3[%c22] : memref<32xf32, #tpu.memory_space<smem>>
    %368 = vector.broadcast %367 : f32 to vector<1x128xf32>
    %369 = arith.mulf %368, %9 : vector<1x128xf32>
    %c22_102 = arith.constant 22 : index
    %370 = memref.load %arg4[%c22_102] : memref<32xf32, #tpu.memory_space<smem>>
    %371 = vector.broadcast %370 : f32 to vector<1x128xf32>
    %372 = arith.mulf %371, %13 : vector<1x128xf32>
    %373 = arith.addf %369, %372 : vector<1x128xf32>
    %c22_103 = arith.constant 22 : index
    %374 = memref.load %arg5[%c22_103] : memref<32xf32, #tpu.memory_space<smem>>
    %375 = vector.broadcast %374 : f32 to vector<1x128xf32>
    %376 = arith.addf %373, %375 : vector<1x128xf32>
    %cst_104 = arith.constant 0.000000e+00 : f32
    %377 = vector.broadcast %cst_104 : f32 to vector<1x128xf32>
    %378 = arith.maximumf %376, %377 : vector<1x128xf32>
    %c22_105 = arith.constant 22 : index
    %379 = memref.load %arg6[%c22_105] : memref<32xf32, #tpu.memory_space<smem>>
    %380 = vector.broadcast %379 : f32 to vector<1x128xf32>
    %381 = arith.mulf %380, %378 : vector<1x128xf32>
    %382 = arith.addf %366, %381 : vector<1x128xf32>
    %c23 = arith.constant 23 : index
    %383 = memref.load %arg3[%c23] : memref<32xf32, #tpu.memory_space<smem>>
    %384 = vector.broadcast %383 : f32 to vector<1x128xf32>
    %385 = arith.mulf %384, %9 : vector<1x128xf32>
    %c23_106 = arith.constant 23 : index
    %386 = memref.load %arg4[%c23_106] : memref<32xf32, #tpu.memory_space<smem>>
    %387 = vector.broadcast %386 : f32 to vector<1x128xf32>
    %388 = arith.mulf %387, %13 : vector<1x128xf32>
    %389 = arith.addf %385, %388 : vector<1x128xf32>
    %c23_107 = arith.constant 23 : index
    %390 = memref.load %arg5[%c23_107] : memref<32xf32, #tpu.memory_space<smem>>
    %391 = vector.broadcast %390 : f32 to vector<1x128xf32>
    %392 = arith.addf %389, %391 : vector<1x128xf32>
    %cst_108 = arith.constant 0.000000e+00 : f32
    %393 = vector.broadcast %cst_108 : f32 to vector<1x128xf32>
    %394 = arith.maximumf %392, %393 : vector<1x128xf32>
    %c23_109 = arith.constant 23 : index
    %395 = memref.load %arg6[%c23_109] : memref<32xf32, #tpu.memory_space<smem>>
    %396 = vector.broadcast %395 : f32 to vector<1x128xf32>
    %397 = arith.mulf %396, %394 : vector<1x128xf32>
    %398 = arith.addf %382, %397 : vector<1x128xf32>
    %c24 = arith.constant 24 : index
    %399 = memref.load %arg3[%c24] : memref<32xf32, #tpu.memory_space<smem>>
    %400 = vector.broadcast %399 : f32 to vector<1x128xf32>
    %401 = arith.mulf %400, %9 : vector<1x128xf32>
    %c24_110 = arith.constant 24 : index
    %402 = memref.load %arg4[%c24_110] : memref<32xf32, #tpu.memory_space<smem>>
    %403 = vector.broadcast %402 : f32 to vector<1x128xf32>
    %404 = arith.mulf %403, %13 : vector<1x128xf32>
    %405 = arith.addf %401, %404 : vector<1x128xf32>
    %c24_111 = arith.constant 24 : index
    %406 = memref.load %arg5[%c24_111] : memref<32xf32, #tpu.memory_space<smem>>
    %407 = vector.broadcast %406 : f32 to vector<1x128xf32>
    %408 = arith.addf %405, %407 : vector<1x128xf32>
    %cst_112 = arith.constant 0.000000e+00 : f32
    %409 = vector.broadcast %cst_112 : f32 to vector<1x128xf32>
    %410 = arith.maximumf %408, %409 : vector<1x128xf32>
    %c24_113 = arith.constant 24 : index
    %411 = memref.load %arg6[%c24_113] : memref<32xf32, #tpu.memory_space<smem>>
    %412 = vector.broadcast %411 : f32 to vector<1x128xf32>
    %413 = arith.mulf %412, %410 : vector<1x128xf32>
    %414 = arith.addf %398, %413 : vector<1x128xf32>
    %c25 = arith.constant 25 : index
    %415 = memref.load %arg3[%c25] : memref<32xf32, #tpu.memory_space<smem>>
    %416 = vector.broadcast %415 : f32 to vector<1x128xf32>
    %417 = arith.mulf %416, %9 : vector<1x128xf32>
    %c25_114 = arith.constant 25 : index
    %418 = memref.load %arg4[%c25_114] : memref<32xf32, #tpu.memory_space<smem>>
    %419 = vector.broadcast %418 : f32 to vector<1x128xf32>
    %420 = arith.mulf %419, %13 : vector<1x128xf32>
    %421 = arith.addf %417, %420 : vector<1x128xf32>
    %c25_115 = arith.constant 25 : index
    %422 = memref.load %arg5[%c25_115] : memref<32xf32, #tpu.memory_space<smem>>
    %423 = vector.broadcast %422 : f32 to vector<1x128xf32>
    %424 = arith.addf %421, %423 : vector<1x128xf32>
    %cst_116 = arith.constant 0.000000e+00 : f32
    %425 = vector.broadcast %cst_116 : f32 to vector<1x128xf32>
    %426 = arith.maximumf %424, %425 : vector<1x128xf32>
    %c25_117 = arith.constant 25 : index
    %427 = memref.load %arg6[%c25_117] : memref<32xf32, #tpu.memory_space<smem>>
    %428 = vector.broadcast %427 : f32 to vector<1x128xf32>
    %429 = arith.mulf %428, %426 : vector<1x128xf32>
    %430 = arith.addf %414, %429 : vector<1x128xf32>
    %c26 = arith.constant 26 : index
    %431 = memref.load %arg3[%c26] : memref<32xf32, #tpu.memory_space<smem>>
    %432 = vector.broadcast %431 : f32 to vector<1x128xf32>
    %433 = arith.mulf %432, %9 : vector<1x128xf32>
    %c26_118 = arith.constant 26 : index
    %434 = memref.load %arg4[%c26_118] : memref<32xf32, #tpu.memory_space<smem>>
    %435 = vector.broadcast %434 : f32 to vector<1x128xf32>
    %436 = arith.mulf %435, %13 : vector<1x128xf32>
    %437 = arith.addf %433, %436 : vector<1x128xf32>
    %c26_119 = arith.constant 26 : index
    %438 = memref.load %arg5[%c26_119] : memref<32xf32, #tpu.memory_space<smem>>
    %439 = vector.broadcast %438 : f32 to vector<1x128xf32>
    %440 = arith.addf %437, %439 : vector<1x128xf32>
    %cst_120 = arith.constant 0.000000e+00 : f32
    %441 = vector.broadcast %cst_120 : f32 to vector<1x128xf32>
    %442 = arith.maximumf %440, %441 : vector<1x128xf32>
    %c26_121 = arith.constant 26 : index
    %443 = memref.load %arg6[%c26_121] : memref<32xf32, #tpu.memory_space<smem>>
    %444 = vector.broadcast %443 : f32 to vector<1x128xf32>
    %445 = arith.mulf %444, %442 : vector<1x128xf32>
    %446 = arith.addf %430, %445 : vector<1x128xf32>
    %c27 = arith.constant 27 : index
    %447 = memref.load %arg3[%c27] : memref<32xf32, #tpu.memory_space<smem>>
    %448 = vector.broadcast %447 : f32 to vector<1x128xf32>
    %449 = arith.mulf %448, %9 : vector<1x128xf32>
    %c27_122 = arith.constant 27 : index
    %450 = memref.load %arg4[%c27_122] : memref<32xf32, #tpu.memory_space<smem>>
    %451 = vector.broadcast %450 : f32 to vector<1x128xf32>
    %452 = arith.mulf %451, %13 : vector<1x128xf32>
    %453 = arith.addf %449, %452 : vector<1x128xf32>
    %c27_123 = arith.constant 27 : index
    %454 = memref.load %arg5[%c27_123] : memref<32xf32, #tpu.memory_space<smem>>
    %455 = vector.broadcast %454 : f32 to vector<1x128xf32>
    %456 = arith.addf %453, %455 : vector<1x128xf32>
    %cst_124 = arith.constant 0.000000e+00 : f32
    %457 = vector.broadcast %cst_124 : f32 to vector<1x128xf32>
    %458 = arith.maximumf %456, %457 : vector<1x128xf32>
    %c27_125 = arith.constant 27 : index
    %459 = memref.load %arg6[%c27_125] : memref<32xf32, #tpu.memory_space<smem>>
    %460 = vector.broadcast %459 : f32 to vector<1x128xf32>
    %461 = arith.mulf %460, %458 : vector<1x128xf32>
    %462 = arith.addf %446, %461 : vector<1x128xf32>
    %c28 = arith.constant 28 : index
    %463 = memref.load %arg3[%c28] : memref<32xf32, #tpu.memory_space<smem>>
    %464 = vector.broadcast %463 : f32 to vector<1x128xf32>
    %465 = arith.mulf %464, %9 : vector<1x128xf32>
    %c28_126 = arith.constant 28 : index
    %466 = memref.load %arg4[%c28_126] : memref<32xf32, #tpu.memory_space<smem>>
    %467 = vector.broadcast %466 : f32 to vector<1x128xf32>
    %468 = arith.mulf %467, %13 : vector<1x128xf32>
    %469 = arith.addf %465, %468 : vector<1x128xf32>
    %c28_127 = arith.constant 28 : index
    %470 = memref.load %arg5[%c28_127] : memref<32xf32, #tpu.memory_space<smem>>
    %471 = vector.broadcast %470 : f32 to vector<1x128xf32>
    %472 = arith.addf %469, %471 : vector<1x128xf32>
    %cst_128 = arith.constant 0.000000e+00 : f32
    %473 = vector.broadcast %cst_128 : f32 to vector<1x128xf32>
    %474 = arith.maximumf %472, %473 : vector<1x128xf32>
    %c28_129 = arith.constant 28 : index
    %475 = memref.load %arg6[%c28_129] : memref<32xf32, #tpu.memory_space<smem>>
    %476 = vector.broadcast %475 : f32 to vector<1x128xf32>
    %477 = arith.mulf %476, %474 : vector<1x128xf32>
    %478 = arith.addf %462, %477 : vector<1x128xf32>
    %c29 = arith.constant 29 : index
    %479 = memref.load %arg3[%c29] : memref<32xf32, #tpu.memory_space<smem>>
    %480 = vector.broadcast %479 : f32 to vector<1x128xf32>
    %481 = arith.mulf %480, %9 : vector<1x128xf32>
    %c29_130 = arith.constant 29 : index
    %482 = memref.load %arg4[%c29_130] : memref<32xf32, #tpu.memory_space<smem>>
    %483 = vector.broadcast %482 : f32 to vector<1x128xf32>
    %484 = arith.mulf %483, %13 : vector<1x128xf32>
    %485 = arith.addf %481, %484 : vector<1x128xf32>
    %c29_131 = arith.constant 29 : index
    %486 = memref.load %arg5[%c29_131] : memref<32xf32, #tpu.memory_space<smem>>
    %487 = vector.broadcast %486 : f32 to vector<1x128xf32>
    %488 = arith.addf %485, %487 : vector<1x128xf32>
    %cst_132 = arith.constant 0.000000e+00 : f32
    %489 = vector.broadcast %cst_132 : f32 to vector<1x128xf32>
    %490 = arith.maximumf %488, %489 : vector<1x128xf32>
    %c29_133 = arith.constant 29 : index
    %491 = memref.load %arg6[%c29_133] : memref<32xf32, #tpu.memory_space<smem>>
    %492 = vector.broadcast %491 : f32 to vector<1x128xf32>
    %493 = arith.mulf %492, %490 : vector<1x128xf32>
    %494 = arith.addf %478, %493 : vector<1x128xf32>
    %c30 = arith.constant 30 : index
    %495 = memref.load %arg3[%c30] : memref<32xf32, #tpu.memory_space<smem>>
    %496 = vector.broadcast %495 : f32 to vector<1x128xf32>
    %497 = arith.mulf %496, %9 : vector<1x128xf32>
    %c30_134 = arith.constant 30 : index
    %498 = memref.load %arg4[%c30_134] : memref<32xf32, #tpu.memory_space<smem>>
    %499 = vector.broadcast %498 : f32 to vector<1x128xf32>
    %500 = arith.mulf %499, %13 : vector<1x128xf32>
    %501 = arith.addf %497, %500 : vector<1x128xf32>
    %c30_135 = arith.constant 30 : index
    %502 = memref.load %arg5[%c30_135] : memref<32xf32, #tpu.memory_space<smem>>
    %503 = vector.broadcast %502 : f32 to vector<1x128xf32>
    %504 = arith.addf %501, %503 : vector<1x128xf32>
    %cst_136 = arith.constant 0.000000e+00 : f32
    %505 = vector.broadcast %cst_136 : f32 to vector<1x128xf32>
    %506 = arith.maximumf %504, %505 : vector<1x128xf32>
    %c30_137 = arith.constant 30 : index
    %507 = memref.load %arg6[%c30_137] : memref<32xf32, #tpu.memory_space<smem>>
    %508 = vector.broadcast %507 : f32 to vector<1x128xf32>
    %509 = arith.mulf %508, %506 : vector<1x128xf32>
    %510 = arith.addf %494, %509 : vector<1x128xf32>
    %c31 = arith.constant 31 : index
    %511 = memref.load %arg3[%c31] : memref<32xf32, #tpu.memory_space<smem>>
    %512 = vector.broadcast %511 : f32 to vector<1x128xf32>
    %513 = arith.mulf %512, %9 : vector<1x128xf32>
    %c31_138 = arith.constant 31 : index
    %514 = memref.load %arg4[%c31_138] : memref<32xf32, #tpu.memory_space<smem>>
    %515 = vector.broadcast %514 : f32 to vector<1x128xf32>
    %516 = arith.mulf %515, %13 : vector<1x128xf32>
    %517 = arith.addf %513, %516 : vector<1x128xf32>
    %c31_139 = arith.constant 31 : index
    %518 = memref.load %arg5[%c31_139] : memref<32xf32, #tpu.memory_space<smem>>
    %519 = vector.broadcast %518 : f32 to vector<1x128xf32>
    %520 = arith.addf %517, %519 : vector<1x128xf32>
    %cst_140 = arith.constant 0.000000e+00 : f32
    %521 = vector.broadcast %cst_140 : f32 to vector<1x128xf32>
    %522 = arith.maximumf %520, %521 : vector<1x128xf32>
    %c31_141 = arith.constant 31 : index
    %523 = memref.load %arg6[%c31_141] : memref<32xf32, #tpu.memory_space<smem>>
    %524 = vector.broadcast %523 : f32 to vector<1x128xf32>
    %525 = arith.mulf %524, %522 : vector<1x128xf32>
    %526 = arith.addf %510, %525 : vector<1x128xf32>
    %c0_142 = arith.constant 0 : index
    %527 = memref.load %arg2[%c0_142] : memref<1xf32, #tpu.memory_space<smem>>
    %528 = vector.broadcast %527 : f32 to vector<1x128xf32>
    %529 = arith.addf %526, %528 : vector<1x128xf32>
    %c0_143 = arith.constant 0 : index
    %c0_144 = arith.constant 0 : index
    %530 = vector.load %arg11[%c0_143, %c0_144] : memref<1x128xf32, #tpu.memory_space<vmem>>, vector<1x128xf32>
    tpu.vector_store %arg11[%c0_143, %c0_144], %529 {strides = array<i32>} : memref<1x128xf32, #tpu.memory_space<vmem>>, vector<1x128xf32>,
    return
  }
  func.func @transform_0(%arg0: i32) -> i32 {
    %c0_i32 = arith.constant 0 : i32
    %c0_i32_0 = arith.constant 0 : i32
    return %c0_i32 : i32
  }
  func.func @transform_1(%arg0: i32) -> i32 {
    %c0_i32 = arith.constant 0 : i32
    %c0_i32_0 = arith.constant 0 : i32
    return %c0_i32 : i32
  }
  func.func @transform_2(%arg0: i32) -> i32 {
    %c0_i32 = arith.constant 0 : i32
    %c0_i32_0 = arith.constant 0 : i32
    return %c0_i32 : i32
  }
  func.func @transform_3(%arg0: i32) -> i32 {
    %c0_i32 = arith.constant 0 : i32
    %c0_i32_0 = arith.constant 0 : i32
    return %c0_i32 : i32
  }
  func.func @transform_4(%arg0: i32) -> i32 {
    %c0_i32 = arith.constant 0 : i32
    %c0_i32_0 = arith.constant 0 : i32
    return %c0_i32 : i32
  }
  func.func @transform_5(%arg0: i32) -> i32 {
    %c0_i32 = arith.constant 0 : i32
    %c0_i32_0 = arith.constant 0 : i32
    return %c0_i32 : i32
  }
  func.func @transform_6(%arg0: i32) -> (i32, i32) {
    %c0_i32 = arith.constant 0 : i32
    %c0_i32_0 = arith.constant 0 : i32
    %c0_i32_1 = arith.constant 0 : i32
    return %c0_i32, %c0_i32_0 : i32, i32
  }
  func.func @transform_7(%arg0: i32) -> (i32, i32) {
    %c0_i32 = arith.constant 0 : i32
    %c0_i32_0 = arith.constant 0 : i32
    %c0_i32_1 = arith.constant 0 : i32
    return %c0_i32, %c0_i32_0 : i32, i32
  }
  func.func @transform_8(%arg0: i32) -> (i32, i32) {
    %c0_i32 = arith.constant 0 : i32
    %c0_i32_0 = arith.constant 0 : i32
    %c0_i32_1 = arith.constant 0 : i32
    return %c0_i32, %c0_i32_0 : i32, i32
  }
  func.func @transform_9(%arg0: i32) -> (i32, i32) {
    %c0_i32 = arith.constant 0 : i32
    %c0_i32_0 = arith.constant 0 : i32
    %c0_i32_1 = arith.constant 0 : i32
    return %c0_i32, %c0_i32_0 : i32, i32
  }
  func.func @transform_10(%arg0: i32) -> (i32, i32) {
    %c0_i32 = arith.constant 0 : i32
    %c0_i32_0 = arith.constant 0 : i32
    %c0_i32_1 = arith.constant 0 : i32
    return %c0_i32, %c0_i32_0 : i32, i32
  }
}

</mosaic_0001>

<llo_original>
// kernel: fwd.1
$region0: #{fwd.1}
  #allocation0 [shape = 'u32[]', space=smem, size = 0x4, offset = 0x4, fixed_abs, tag = 'smem constant byte address 0x4 - core index']
  #allocation1 [shape = 'u32[144,128]{1,0:T(1,128)}', space=vmem, size = 0x12000, scoped, tag = 'internal scratch']
  #allocation2 [shape = 'f32[1]{0:T(128)S(6)}', space=smem, size = 0x200, scoped, tag = 'scoped memory for fwd.1']
  #allocation3 [shape = 'f32[1]{0:T(128)S(6)}', space=smem, size = 0x200, scoped, tag = 'scoped memory for fwd.1']
  %s0 = inlined_call_operand.<no memory space> [shape: f32[1], index: 0, kind: input, shape index: {}]
  %s1 = inlined_call_operand.<no memory space> [shape: f32[1], index: 1, kind: input, shape index: {}]
  %s2 = inlined_call_operand.vmem [shape: f32[32], index: 2, kind: input, shape index: {}]
  %s3 = inlined_call_operand.vmem [shape: f32[32], index: 3, kind: input, shape index: {}]
  %s4 = inlined_call_operand.vmem [shape: f32[32], index: 4, kind: input, shape index: {}]
  %s5 = inlined_call_operand.vmem [shape: f32[32], index: 5, kind: input, shape index: {}]
  %s6 = inlined_call_operand.vmem [shape: bf16[1,128], index: 6, kind: input, shape index: {}]
  %s7 = inlined_call_operand.vmem [shape: bf16[128,128], index: 7, kind: input, shape index: {}]
  %s8 = inlined_call_operand.vmem [shape: f32[128,2], index: 8, kind: input, shape index: {}]
  %s9 = inlined_call_operand.vmem [shape: f32[2,128], index: 9, kind: input, shape index: {}]
  %s10 = inlined_call_operand.vmem [shape: f32[1,128], index: 10, kind: output, shape index: {}]
  %s11 = sld [smem:[#allocation0]]
  $region66: #{fwd.1} parent=0
    _
  %s13 = ssub.s32 1, %s11
  %s14 = scalar_select 0, %s13, %s11
  %15 = sst [smem:[#allocation2]] %s0
  %16 = sst [smem:[#allocation3]] %s1
  $region1: #{fwd.1} parent=0
    #allocation4 [shape = 'u8[512]{0}', space=smem, size = 0x200, scoped, tag = 'input window, operand 2, single buffered']
    #allocation5 [shape = 's32[1]{0}', space=sflag, size = 0x4, scoped, tag = 'scoped memory for fwd.1']
    #allocation6 [shape = 'u8[512]{0}', space=smem, size = 0x200, scoped, tag = 'input window, operand 3, single buffered']
    #allocation7 [shape = 's32[1]{0}', space=sflag, size = 0x4, scoped, tag = 'scoped memory for fwd.1']
    #allocation8 [shape = 'u8[512]{0}', space=smem, size = 0x200, scoped, tag = 'input window, operand 4, single buffered']
    #allocation9 [shape = 'u8[512]{0}', space=smem, size = 0x200, scoped, tag = 'input window, operand 5, single buffered']
    #allocation10 [shape = 's32[1]{0}', space=sflag, size = 0x4, scoped, tag = 'scoped memory for fwd.1']
    %17 = vsyncpa [#allocation5], 0
    %18 = vsyncpa [#allocation7], 0
    %19 = vsyncpa [#allocation10], 0
    // Predicated region
    $region2: #{fwd.1} parent=1 // pred_check
      _
    $region3: #{fwd.1} parent=1 // pred_check_branch
      %21 = sbr.rel (0) target = $region5
    $region4: #{fwd.1} parent=1 // pred_region
      _
    $region5: #{fwd.1} parent=1 // pred_fallthru
      _
    // Predicated region
    $region6: #{fwd.1} parent=1 // pred_check
      _
    $region7: #{fwd.1} parent=1 // pred_check_branch
      %23 = sbr.rel (0) target = $region9
    $region8: #{fwd.1} parent=1 // pred_region
      _
    $region9: #{fwd.1} parent=1 // pred_fallthru
      _
    // Predicated region
    $region10: #{fwd.1} parent=1 // pred_check
      _
    $region11: #{fwd.1} parent=1 // pred_check_branch
      %25 = sbr.rel (0) target = $region13
    $region12: #{fwd.1} parent=1 // pred_region
      %s27 = ssub.s32 16, 16
      %28 = vsyncadd [#allocation5], %s27
      %s30 = sshll.u32 %s2, 4
      %s31 = int_to_ptr.vmem [resolvable:$true] %s30
      %33 = dma.vmem_to_smem %s31, 16, [#allocation4], [#allocation5]
    $region13: #{fwd.1} parent=1 // pred_fallthru
      _
    // Predicated region
    $region14: #{fwd.1} parent=1 // pred_check
      _
    $region15: #{fwd.1} parent=1 // pred_check_branch
      %35 = sbr.rel (0) target = $region17
    $region16: #{fwd.1} parent=1 // pred_region
      %s37 = ssub.s32 16, 16
      %38 = vsyncadd [#allocation7], %s37
      %s40 = sshll.u32 %s3, 4
      %s41 = int_to_ptr.vmem [resolvable:$true] %s40
      %43 = dma.vmem_to_smem %s41, 16, [#allocation6], [#allocation7]
    $region17: #{fwd.1} parent=1 // pred_fallthru
      _
    // Predicated region
    $region18: #{fwd.1} parent=1 // pred_check
      _
    $region19: #{fwd.1} parent=1 // pred_check_branch
      %45 = sbr.rel (0) target = $region21
    $region20: #{fwd.1} parent=1 // pred_region
      %s47 = ssub.s32 16, 16
      %48 = vsyncadd [#allocation7], %s47
      %s50 = sshll.u32 %s4, 4
      %s51 = int_to_ptr.vmem [resolvable:$true] %s50
      %53 = dma.vmem_to_smem %s51, 16, [#allocation8], [#allocation7]
    $region21: #{fwd.1} parent=1 // pred_fallthru
      _
    // Predicated region
    $region22: #{fwd.1} parent=1 // pred_check
      _
    $region23: #{fwd.1} parent=1 // pred_check_branch
      %55 = sbr.rel (0) target = $region25
    $region24: #{fwd.1} parent=1 // pred_region
      %s57 = ssub.s32 16, 16
      %58 = vsyncadd [#allocation10], %s57
      %s60 = sshll.u32 %s5, 4
      %s61 = int_to_ptr.vmem [resolvable:$true] %s60
      %63 = dma.vmem_to_smem %s61, 16, [#allocation9], [#allocation10]
    $region25: #{fwd.1} parent=1 // pred_fallthru
      _
    // Predicated region
    $region26: #{fwd.1} parent=1 // pred_check
      _
    $region27: #{fwd.1} parent=1 // pred_check_branch
      %65 = sbr.rel (0) target = $region29
    $region28: #{fwd.1} parent=1 // pred_region
      _
    $region29: #{fwd.1} parent=1 // pred_fallthru
      _
    // Predicated region
    $region30: #{fwd.1} parent=1 // pred_check
      _
    $region31: #{fwd.1} parent=1 // pred_check_branch
      %67 = sbr.rel (0) target = $region33
    $region32: #{fwd.1} parent=1 // pred_region
      _
    $region33: #{fwd.1} parent=1 // pred_fallthru
      _
    // Predicated region
    $region34: #{fwd.1} parent=1 // pred_check
      _
    $region35: #{fwd.1} parent=1 // pred_check_branch
      %69 = sbr.rel (0) target = $region37
    $region36: #{fwd.1} parent=1 // pred_region
      _
    $region37: #{fwd.1} parent=1 // pred_fallthru
      _
    // Predicated region
    $region38: #{fwd.1} parent=1 // pred_check
      _
    $region39: #{fwd.1} parent=1 // pred_check_branch
      %71 = sbr.rel (0) target = $region41
    $region40: #{fwd.1} parent=1 // pred_region
      _
    $region41: #{fwd.1} parent=1 // pred_fallthru
      _
    // Predicated region
    $region42: #{fwd.1} parent=1 // pred_check
      _
    $region43: #{fwd.1} parent=1 // pred_check_branch
      %73 = sbr.rel (0) target = $region45
    $region44: #{fwd.1} parent=1 // pred_region
      %74 = dma.done [#allocation5], 16
    $region45: #{fwd.1} parent=1 // pred_fallthru
      _
    // Predicated region
    $region46: #{fwd.1} parent=1 // pred_check
      _
    $region47: #{fwd.1} parent=1 // pred_check_branch
      %76 = sbr.rel (0) target = $region49
    $region48: #{fwd.1} parent=1 // pred_region
      %77 = dma.done [#allocation7], 16
    $region49: #{fwd.1} parent=1 // pred_fallthru
      _
    // Predicated region
    $region50: #{fwd.1} parent=1 // pred_check
      _
    $region51: #{fwd.1} parent=1 // pred_check_branch
      %79 = sbr.rel (0) target = $region53
    $region52: #{fwd.1} parent=1 // pred_region
      %80 = dma.done [#allocation7], 16
    $region53: #{fwd.1} parent=1 // pred_fallthru
      _
    // Predicated region
    $region54: #{fwd.1} parent=1 // pred_check
      _
    $region55: #{fwd.1} parent=1 // pred_check_branch
      %82 = sbr.rel (0) target = $region57
    $region56: #{fwd.1} parent=1 // pred_region
      %83 = dma.done [#allocation10], 16
    $region57: #{fwd.1} parent=1 // pred_fallthru
      _
    %84 = sfence
    %v86 = vld [vmem:[%s7] sm:$0xf]
    %v87 = vld [vmem:[%s7 + $0x4] sm:$0xf]
    %v88 = vld [vmem:[%s7 + $0x8] sm:$0xf]
    %v89 = vld [vmem:[%s7 + $0xc] sm:$0xf]
    %v90 = vld [vmem:[%s7 + $0x10] sm:$0xf]
    %v91 = vld [vmem:[%s7 + $0x14] sm:$0xf]
    %v92 = vld [vmem:[%s7 + $0x18] sm:$0xf]
    %v93 = vld [vmem:[%s7 + $0x1c] sm:$0xf]
    %v94 = vld [vmem:[%s7 + $0x20] sm:$0xf]
    %v95 = vld [vmem:[%s7 + $0x24] sm:$0xf]
    %v96 = vld [vmem:[%s7 + $0x28] sm:$0xf]
    %v97 = vld [vmem:[%s7 + $0x2c] sm:$0xf]
    %v98 = vld [vmem:[%s7 + $0x30] sm:$0xf]
    %v99 = vld [vmem:[%s7 + $0x34] sm:$0xf]
    %v100 = vld [vmem:[%s7 + $0x38] sm:$0xf]
    %v101 = vld [vmem:[%s7 + $0x3c] sm:$0xf]
    %v102 = vld [vmem:[%s6] sm:$0x1]
    %s103 = sld [smem:[#allocation2]]
    %v104 = vstv %s103
    %v121 = vunpack.c.l.b16 %v86
    %v122 = vunpack.c.l.b16 %v87
    %v123 = vunpack.c.l.b16 %v88
    %v124 = vunpack.c.l.b16 %v89
    %v125 = vunpack.c.l.b16 %v90
    %v126 = vunpack.c.l.b16 %v91
    %v127 = vunpack.c.l.b16 %v92
    %v128 = vunpack.c.l.b16 %v93
    %v129 = vunpack.c.l.b16 %v94
    %v130 = vunpack.c.l.b16 %v95
    %v131 = vunpack.c.l.b16 %v96
    %v132 = vunpack.c.l.b16 %v97
    %v133 = vunpack.c.l.b16 %v98
    %v134 = vunpack.c.l.b16 %v99
    %v135 = vunpack.c.l.b16 %v100
    %v136 = vunpack.c.l.b16 %v101
    %v137 = vpack.c.b16 %v122, %v121
    %v138 = vpack.c.b16 %v124, %v123
    %v139 = vpack.c.b16 %v126, %v125
    %v140 = vpack.c.b16 %v128, %v127
    %v141 = vpack.c.b16 %v130, %v129
    %v142 = vpack.c.b16 %v132, %v131
    %v143 = vpack.c.b16 %v134, %v133
    %v144 = vpack.c.b16 %v136, %v135
    %153 = vmatprep.subr.bf16.mxu0 0
    %154 = vmatpush1.bf16.msra.mxu0 %v137
    %155 = vmatprep.subr.bf16.mxu0 0
    %156 = vmatpush1.bf16.msra.mxu0 %v138
    %157 = vmatprep.subr.bf16.mxu0 0
    %158 = vmatpush1.bf16.msra.mxu0 %v139
    %159 = vmatprep.subr.bf16.mxu0 0
    %160 = vmatpush1.bf16.msra.mxu0 %v140
    %161 = vmatprep.subr.bf16.mxu0 0
    %162 = vmatpush1.bf16.msra.mxu0 %v141
    %163 = vmatprep.subr.bf16.mxu0 0
    %164 = vmatpush1.bf16.msra.mxu0 %v142
    %165 = vmatprep.subr.bf16.mxu0 0
    %166 = vmatpush1.bf16.msra.mxu0 %v143
    %167 = vmatprep.subr.bf16.mxu0 0
    %168 = vmatpush1.bf16.msra.mxu0 %v144
    %169 = vmatprep.subr.bf16.mxu0 0
    %170 = vmatpush1.bf16.msra.mxu0 0
    %171 = vmatprep.subr.bf16.mxu0 0
    %172 = vmatpush1.bf16.msra.mxu0 0
    %173 = vmatprep.subr.bf16.mxu0 0
    %174 = vmatpush1.bf16.msra.mxu0 0
    %175 = vmatprep.subr.bf16.mxu0 0
    %176 = vmatpush1.bf16.msra.mxu0 0
    %177 = vmatprep.subr.bf16.mxu0 0
    %178 = vmatpush1.bf16.msra.mxu0 0
    %179 = vmatprep.subr.bf16.mxu0 0
    %180 = vmatpush1.bf16.msra.mxu0 0
    %181 = vmatprep.subr.bf16.mxu0 0
    %182 = vmatpush1.bf16.msra.mxu0 0
    %183 = vmatprep.subr.bf16.mxu0 0
    %184 = vmatpush1.bf16.msra.mxu0 0
    %185 = vmatprep.mubr.bf16.mxu0 0
    %186 = vmatmul.mubr.bf16.gmra.mrb[0].mxu0 %v102
    %v187 = vpop.f32.mrb[0].mxu0
    %v188 = vadd.f32 %v104, %v187
    %v189 = vpop.f32.mrb[0].mxu0
    %v190 = vpop.f32.mrb[0].mxu0
    %v191 = vpop.f32.mrb[0].mxu0
    %192 = vdwg.mxu0
    %v193 = vmax.f32 %v188, 0.0
    %v194 = vpack.c.bf16 %v193, %v193
    %195 = vmatprep.subr.bf16.mxu0 0
    %196 = vmatpush1.bf16.msra.mxu0 %v137
    %197 = vmatprep.subr.bf16.mxu0 0
    %198 = vmatpush1.bf16.msra.mxu0 %v138
    %199 = vmatprep.subr.bf16.mxu0 0
    %200 = vmatpush1.bf16.msra.mxu0 %v139
    %201 = vmatprep.subr.bf16.mxu0 0
    %202 = vmatpush1.bf16.msra.mxu0 %v140
    %203 = vmatprep.subr.bf16.mxu0 0
    %204 = vmatpush1.bf16.msra.mxu0 %v141
    %205 = vmatprep.subr.bf16.mxu0 0
    %206 = vmatpush1.bf16.msra.mxu0 %v142
    %207 = vmatprep.subr.bf16.mxu0 0
    %208 = vmatpush1.bf16.msra.mxu0 %v143
    %209 = vmatprep.subr.bf16.mxu0 0
    %210 = vmatpush1.bf16.msra.mxu0 %v144
    %211 = vmatprep.subr.bf16.mxu0 0
    %212 = vmatpush1.bf16.msra.mxu0 0
    %213 = vmatprep.subr.bf16.mxu0 0
    %214 = vmatpush1.bf16.msra.mxu0 0
    %215 = vmatprep.subr.bf16.mxu0 0
    %216 = vmatpush1.bf16.msra.mxu0 0
    %217 = vmatprep.subr.bf16.mxu0 0
    %218 = vmatpush1.bf16.msra.mxu0 0
    %219 = vmatprep.subr.bf16.mxu0 0
    %220 = vmatpush1.bf16.msra.mxu0 0
    %221 = vmatprep.subr.bf16.mxu0 0
    %222 = vmatpush1.bf16.msra.mxu0 0
    %223 = vmatprep.subr.bf16.mxu0 0
    %224 = vmatpush1.bf16.msra.mxu0 0
    %225 = vmatprep.subr.bf16.mxu0 0
    %226 = vmatpush1.bf16.msra.mxu0 0
    %227 = vmatprep.mubr.bf16.mxu0 0
    %228 = vmatmul.mubr.bf16.gmra.mrb[0].mxu0 %v194
    %v229 = vpop.f32.mrb[0].mxu0
    %v230 = vadd.f32 0.0, %v229
    %v231 = vpop.f32.mrb[0].mxu0
    %v232 = vpop.f32.mrb[0].mxu0
    %v233 = vpop.f32.mrb[0].mxu0
    %234 = vdwg.mxu0
    %v235 = vld [vmem:[%s8] sm:$0xff]
    %v236 = vld [vmem:[%s8 + $0x8] sm:$0xff]
    %v237 = vld [vmem:[%s8 + $0x10] sm:$0xff]
    %v238 = vld [vmem:[%s8 + $0x18] sm:$0xff]
    %v239 = vld [vmem:[%s8 + $0x20] sm:$0xff]
    %v240 = vld [vmem:[%s8 + $0x28] sm:$0xff]
    %v241 = vld [vmem:[%s8 + $0x30] sm:$0xff]
    %v242 = vld [vmem:[%s8 + $0x38] sm:$0xff]
    %v243 = vld [vmem:[%s8 + $0x40] sm:$0xff]
    %v244 = vld [vmem:[%s8 + $0x48] sm:$0xff]
    %v245 = vld [vmem:[%s8 + $0x50] sm:$0xff]
    %v246 = vld [vmem:[%s8 + $0x58] sm:$0xff]
    %v247 = vld [vmem:[%s8 + $0x60] sm:$0xff]
    %v248 = vld [vmem:[%s8 + $0x68] sm:$0xff]
    %v249 = vld [vmem:[%s8 + $0x70] sm:$0xff]
    %v250 = vld [vmem:[%s8 + $0x78] sm:$0xff]
    %251 = vmatprep.subr.mxu0 0.0
    %252 = vmatpush1.msra.mxu0 %v235
    %253 = vmatprep.subr.mxu0 0.0
    %254 = vmatpush1.msra.mxu0 %v236
    %255 = vmatprep.subr.mxu0 0.0
    %256 = vmatpush1.msra.mxu0 %v237
    %257 = vmatprep.subr.mxu0 0.0
    %258 = vmatpush1.msra.mxu0 %v238
    %259 = vmatprep.subr.mxu0 0.0
    %260 = vmatpush1.msra.mxu0 %v239
    %261 = vmatprep.subr.mxu0 0.0
    %262 = vmatpush1.msra.mxu0 %v240
    %263 = vmatprep.subr.mxu0 0.0
    %264 = vmatpush1.msra.mxu0 %v241
    %265 = vmatprep.subr.mxu0 0.0
    %266 = vmatpush1.msra.mxu0 %v242
    %267 = vmatprep.subr.mxu0 0.0
    %268 = vmatpush1.msra.mxu0 %v243
    %269 = vmatprep.subr.mxu0 0.0
    %270 = vmatpush1.msra.mxu0 %v244
    %271 = vmatprep.subr.mxu0 0.0
    %272 = vmatpush1.msra.mxu0 %v245
    %273 = vmatprep.subr.mxu0 0.0
    %274 = vmatpush1.msra.mxu0 %v246
    %275 = vmatprep.subr.mxu0 0.0
    %276 = vmatpush1.msra.mxu0 %v247
    %277 = vmatprep.subr.mxu0 0.0
    %278 = vmatpush1.msra.mxu0 %v248
    %279 = vmatprep.subr.mxu0 0.0
    %280 = vmatpush1.msra.mxu0 %v249
    %281 = vmatprep.subr.mxu0 0.0
    %282 = vmatpush1.msra.mxu0 %v250
    %283 = vmatprep.subr.mxu0 0.0
    %284 = vmatpush1.msra.mxu0 0.0
    %285 = vmatprep.subr.mxu0 0.0
    %286 = vmatpush1.msra.mxu0 0.0
    %287 = vmatprep.subr.mxu0 0.0
    %288 = vmatpush1.msra.mxu0 0.0
    %289 = vmatprep.subr.mxu0 0.0
    %290 = vmatpush1.msra.mxu0 0.0
    %291 = vmatprep.subr.mxu0 0.0
    %292 = vmatpush1.msra.mxu0 0.0
    %293 = vmatprep.subr.mxu0 0.0
    %294 = vmatpush1.msra.mxu0 0.0
    %295 = vmatprep.subr.mxu0 0.0
    %296 = vmatpush1.msra.mxu0 0.0
    %297 = vmatprep.subr.mxu0 0.0
    %298 = vmatpush1.msra.mxu0 0.0
    %299 = vmatprep.subr.mxu0 0.0
    %300 = vmatpush1.msra.mxu0 0.0
    %301 = vmatprep.subr.mxu0 0.0
    %302 = vmatpush1.msra.mxu0 0.0
    %303 = vmatprep.subr.mxu0 0.0
    %304 = vmatpush1.msra.mxu0 0.0
    %305 = vmatprep.subr.mxu0 0.0
    %306 = vmatpush1.msra.mxu0 0.0
    %307 = vmatprep.subr.mxu0 0.0
    %308 = vmatpush1.msra.mxu0 0.0
    %309 = vmatprep.subr.mxu0 0.0
    %310 = vmatpush1.msra.mxu0 0.0
    %311 = vmatprep.subr.mxu0 0.0
    %312 = vmatpush1.msra.mxu0 0.0
    %313 = vmatprep.subr.mxu0 0.0
    %314 = vmatpush1.msra.mxu0 0.0
    %315 = vmatprep.mubr.f32.mxu0 0.0
    %316 = vmatmul.mubr.f32.gmra.mrb[0].mxu0 %v230
    %v317 = vpop.f32.mrb[0].mxu0
    %v318 = vadd.f32 0.0, %v317
    %v319 = vpop.f32.mrb[0].mxu0
    %320 = vdwg.mxu0
    %v321 = vld [vmem:[%s9] sm:$0x3]
    %vm322 = vcmask 15360
    %v324 = vsel %vm322, %v318, 0
    %vm326 = vcmask 1041408
    %v328 = vsel %vm326, %v321, 0
    %330 = vmatprep.subr.mxu0 0.0
    %331 = vmatpush1.msra.mxu0 %v328
    %332 = vmatprep.subr.mxu0 0.0
    %333 = vmatpush1.msra.mxu0 0.0
    %334 = vmatprep.subr.mxu0 0.0
    %335 = vmatpush1.msra.mxu0 0.0
    %336 = vmatprep.subr.mxu0 0.0
    %337 = vmatpush1.msra.mxu0 0.0
    %338 = vmatprep.subr.mxu0 0.0
    %339 = vmatpush1.msra.mxu0 0.0
    %340 = vmatprep.subr.mxu0 0.0
    %341 = vmatpush1.msra.mxu0 0.0
    %342 = vmatprep.subr.mxu0 0.0
    %343 = vmatpush1.msra.mxu0 0.0
    %344 = vmatprep.subr.mxu0 0.0
    %345 = vmatpush1.msra.mxu0 0.0
    %346 = vmatprep.subr.mxu0 0.0
    %347 = vmatpush1.msra.mxu0 0.0
    %348 = vmatprep.subr.mxu0 0.0
    %349 = vmatpush1.msra.mxu0 0.0
    %350 = vmatprep.subr.mxu0 0.0
    %351 = vmatpush1.msra.mxu0 0.0
    %352 = vmatprep.subr.mxu0 0.0
    %353 = vmatpush1.msra.mxu0 0.0
    %354 = vmatprep.subr.mxu0 0.0
    %355 = vmatpush1.msra.mxu0 0.0
    %356 = vmatprep.subr.mxu0 0.0
    %357 = vmatpush1.msra.mxu0 0.0
    %358 = vmatprep.subr.mxu0 0.0
    %359 = vmatpush1.msra.mxu0 0.0
    %360 = vmatprep.subr.mxu0 0.0
    %361 = vmatpush1.msra.mxu0 0.0
    %362 = vmatprep.subr.mxu0 0.0
    %363 = vmatpush1.msra.mxu0 0.0
    %364 = vmatprep.subr.mxu0 0.0
    %365 = vmatpush1.msra.mxu0 0.0
    %366 = vmatprep.subr.mxu0 0.0
    %367 = vmatpush1.msra.mxu0 0.0
    %368 = vmatprep.subr.mxu0 0.0
    %369 = vmatpush1.msra.mxu0 0.0
    %370 = vmatprep.subr.mxu0 0.0
    %371 = vmatpush1.msra.mxu0 0.0
    %372 = vmatprep.subr.mxu0 0.0
    %373 = vmatpush1.msra.mxu0 0.0
    %374 = vmatprep.subr.mxu0 0.0
    %375 = vmatpush1.msra.mxu0 0.0
    %376 = vmatprep.subr.mxu0 0.0
    %377 = vmatpush1.msra.mxu0 0.0
    %378 = vmatprep.subr.mxu0 0.0
    %379 = vmatpush1.msra.mxu0 0.0
    %380 = vmatprep.subr.mxu0 0.0
    %381 = vmatpush1.msra.mxu0 0.0
    %382 = vmatprep.subr.mxu0 0.0
    %383 = vmatpush1.msra.mxu0 0.0
    %384 = vmatprep.subr.mxu0 0.0
    %385 = vmatpush1.msra.mxu0 0.0
    %386 = vmatprep.subr.mxu0 0.0
    %387 = vmatpush1.msra.mxu0 0.0
    %388 = vmatprep.subr.mxu0 0.0
    %389 = vmatpush1.msra.mxu0 0.0
    %390 = vmatprep.subr.mxu0 0.0
    %391 = vmatpush1.msra.mxu0 0.0
    %392 = vmatprep.subr.mxu0 0.0
    %393 = vmatpush1.msra.mxu0 0.0
    %394 = vmatprep.mubr.f32.mxu0 0.0
    %395 = vmatmul.mubr.f32.gmra.mrb[0].mxu0 %v324
    %v396 = vpop.f32.mrb[0].mxu0
    %v397 = vadd.f32 0.0, %v396
    %v398 = vpop.f32.mrb[0].mxu0
    %399 = vdwg.mxu0
    %s400 = sld [smem:[#allocation4]]
    %v401 = vstv %s400
    %v402 = vmul.f32 %v401, %v230
    %s403 = sld [smem:[#allocation6]]
    %v404 = vstv %s403
    %v405 = vmul.f32 %v404, %v397
    %v406 = vadd.f32 %v402, %v405
    %s407 = sld [smem:[#allocation8]]
    %v408 = vstv %s407
    %v409 = vadd.f32 %v406, %v408
    %v410 = vmax.f32 %v409, 0.0
    %s411 = sld [smem:[#allocation9]]
    %v412 = vstv %s411
    %v413 = vmul.f32 %v412, %v410
    %v414 = vadd.f32 %v413, 0.0
    %s415 = sld [smem:[#allocation4 + $0x1]]
    %v416 = vstv %s415
    %v417 = vmul.f32 %v416, %v230
    %s418 = sld [smem:[#allocation6 + $0x1]]
    %v419 = vstv %s418
    %v420 = vmul.f32 %v419, %v397
    %v421 = vadd.f32 %v417, %v420
    %s422 = sld [smem:[#allocation8 + $0x1]]
    %v423 = vstv %s422
    %v424 = vadd.f32 %v421, %v423
    %v425 = vmax.f32 %v424, 0.0
    %s426 = sld [smem:[#allocation9 + $0x1]]
    %v427 = vstv %s426
    %v428 = vmul.f32 %v427, %v425
    %v429 = vadd.f32 %v414, %v428
    %s430 = sld [smem:[#allocation4 + $0x2]]
    %v431 = vstv %s430
    %v432 = vmul.f32 %v431, %v230
    %s433 = sld [smem:[#allocation6 + $0x2]]
    %v434 = vstv %s433
    %v435 = vmul.f32 %v434, %v397
    %v436 = vadd.f32 %v432, %v435
    %s437 = sld [smem:[#allocation8 + $0x2]]
    %v438 = vstv %s437
    %v439 = vadd.f32 %v436, %v438
    %v440 = vmax.f32 %v439, 0.0
    %s441 = sld [smem:[#allocation9 + $0x2]]
    %v442 = vstv %s441
    %v443 = vmul.f32 %v442, %v440
    %v444 = vadd.f32 %v429, %v443
    %s445 = sld [smem:[#allocation4 + $0x3]]
    %v446 = vstv %s445
    %v447 = vmul.f32 %v446, %v230
    %s448 = sld [smem:[#allocation6 + $0x3]]
    %v449 = vstv %s448
    %v450 = vmul.f32 %v449, %v397
    %v451 = vadd.f32 %v447, %v450
    %s452 = sld [smem:[#allocation8 + $0x3]]
    %v453 = vstv %s452
    %v454 = vadd.f32 %v451, %v453
    %v455 = vmax.f32 %v454, 0.0
    %s456 = sld [smem:[#allocation9 + $0x3]]
    %v457 = vstv %s456
    %v458 = vmul.f32 %v457, %v455
    %v459 = vadd.f32 %v444, %v458
    %s460 = sld [smem:[#allocation4 + $0x4]]
    %v461 = vstv %s460
    %v462 = vmul.f32 %v461, %v230
    %s463 = sld [smem:[#allocation6 + $0x4]]
    %v464 = vstv %s463
    %v465 = vmul.f32 %v464, %v397
    %v466 = vadd.f32 %v462, %v465
    %s467 = sld [smem:[#allocation8 + $0x4]]
    %v468 = vstv %s467
    %v469 = vadd.f32 %v466, %v468
    %v470 = vmax.f32 %v469, 0.0
    %s471 = sld [smem:[#allocation9 + $0x4]]
    %v472 = vstv %s471
    %v473 = vmul.f32 %v472, %v470
    %v474 = vadd.f32 %v459, %v473
    %s475 = sld [smem:[#allocation4 + $0x5]]
    %v476 = vstv %s475
    %v477 = vmul.f32 %v476, %v230
    %s478 = sld [smem:[#allocation6 + $0x5]]
    %v479 = vstv %s478
    %v480 = vmul.f32 %v479, %v397
    %v481 = vadd.f32 %v477, %v480
    %s482 = sld [smem:[#allocation8 + $0x5]]
    %v483 = vstv %s482
    %v484 = vadd.f32 %v481, %v483
    %v485 = vmax.f32 %v484, 0.0
    %s486 = sld [smem:[#allocation9 + $0x5]]
    %v487 = vstv %s486
    %v488 = vmul.f32 %v487, %v485
    %v489 = vadd.f32 %v474, %v488
    %s490 = sld [smem:[#allocation4 + $0x6]]
    %v491 = vstv %s490
    %v492 = vmul.f32 %v491, %v230
    %s493 = sld [smem:[#allocation6 + $0x6]]
    %v494 = vstv %s493
    %v495 = vmul.f32 %v494, %v397
    %v496 = vadd.f32 %v492, %v495
    %s497 = sld [smem:[#allocation8 + $0x6]]
    %v498 = vstv %s497
    %v499 = vadd.f32 %v496, %v498
    %v500 = vmax.f32 %v499, 0.0
    %s501 = sld [smem:[#allocation9 + $0x6]]
    %v502 = vstv %s501
    %v503 = vmul.f32 %v502, %v500
    %v504 = vadd.f32 %v489, %v503
    %s505 = sld [smem:[#allocation4 + $0x7]]
    %v506 = vstv %s505
    %v507 = vmul.f32 %v506, %v230
    %s508 = sld [smem:[#allocation6 + $0x7]]
    %v509 = vstv %s508
    %v510 = vmul.f32 %v509, %v397
    %v511 = vadd.f32 %v507, %v510
    %s512 = sld [smem:[#allocation8 + $0x7]]
    %v513 = vstv %s512
    %v514 = vadd.f32 %v511, %v513
    %v515 = vmax.f32 %v514, 0.0
    %s516 = sld [smem:[#allocation9 + $0x7]]
    %v517 = vstv %s516
    %v518 = vmul.f32 %v517, %v515
    %v519 = vadd.f32 %v504, %v518
    %s520 = sld [smem:[#allocation4 + $0x8]]
    %v521 = vstv %s520
    %v522 = vmul.f32 %v521, %v230
    %s523 = sld [smem:[#allocation6 + $0x8]]
    %v524 = vstv %s523
    %v525 = vmul.f32 %v524, %v397
    %v526 = vadd.f32 %v522, %v525
    %s527 = sld [smem:[#allocation8 + $0x8]]
    %v528 = vstv %s527
    %v529 = vadd.f32 %v526, %v528
    %v530 = vmax.f32 %v529, 0.0
    %s531 = sld [smem:[#allocation9 + $0x8]]
    %v532 = vstv %s531
    %v533 = vmul.f32 %v532, %v530
    %v534 = vadd.f32 %v519, %v533
    %s535 = sld [smem:[#allocation4 + $0x9]]
    %v536 = vstv %s535
    %v537 = vmul.f32 %v536, %v230
    %s538 = sld [smem:[#allocation6 + $0x9]]
    %v539 = vstv %s538
    %v540 = vmul.f32 %v539, %v397
    %v541 = vadd.f32 %v537, %v540
    %s542 = sld [smem:[#allocation8 + $0x9]]
    %v543 = vstv %s542
    %v544 = vadd.f32 %v541, %v543
    %v545 = vmax.f32 %v544, 0.0
    %s546 = sld [smem:[#allocation9 + $0x9]]
    %v547 = vstv %s546
    %v548 = vmul.f32 %v547, %v545
    %v549 = vadd.f32 %v534, %v548
    %s550 = sld [smem:[#allocation4 + $0xa]]
    %v551 = vstv %s550
    %v552 = vmul.f32 %v551, %v230
    %s553 = sld [smem:[#allocation6 + $0xa]]
    %v554 = vstv %s553
    %v555 = vmul.f32 %v554, %v397
    %v556 = vadd.f32 %v552, %v555
    %s557 = sld [smem:[#allocation8 + $0xa]]
    %v558 = vstv %s557
    %v559 = vadd.f32 %v556, %v558
    %v560 = vmax.f32 %v559, 0.0
    %s561 = sld [smem:[#allocation9 + $0xa]]
    %v562 = vstv %s561
    %v563 = vmul.f32 %v562, %v560
    %v564 = vadd.f32 %v549, %v563
    %s565 = sld [smem:[#allocation4 + $0xb]]
    %v566 = vstv %s565
    %v567 = vmul.f32 %v566, %v230
    %s568 = sld [smem:[#allocation6 + $0xb]]
    %v569 = vstv %s568
    %v570 = vmul.f32 %v569, %v397
    %v571 = vadd.f32 %v567, %v570
    %s572 = sld [smem:[#allocation8 + $0xb]]
    %v573 = vstv %s572
    %v574 = vadd.f32 %v571, %v573
    %v575 = vmax.f32 %v574, 0.0
    %s576 = sld [smem:[#allocation9 + $0xb]]
    %v577 = vstv %s576
    %v578 = vmul.f32 %v577, %v575
    %v579 = vadd.f32 %v564, %v578
    %s580 = sld [smem:[#allocation4 + $0xc]]
    %v581 = vstv %s580
    %v582 = vmul.f32 %v581, %v230
    %s583 = sld [smem:[#allocation6 + $0xc]]
    %v584 = vstv %s583
    %v585 = vmul.f32 %v584, %v397
    %v586 = vadd.f32 %v582, %v585
    %s587 = sld [smem:[#allocation8 + $0xc]]
    %v588 = vstv %s587
    %v589 = vadd.f32 %v586, %v588
    %v590 = vmax.f32 %v589, 0.0
    %s591 = sld [smem:[#allocation9 + $0xc]]
    %v592 = vstv %s591
    %v593 = vmul.f32 %v592, %v590
    %v594 = vadd.f32 %v579, %v593
    %s595 = sld [smem:[#allocation4 + $0xd]]
    %v596 = vstv %s595
    %v597 = vmul.f32 %v596, %v230
    %s598 = sld [smem:[#allocation6 + $0xd]]
    %v599 = vstv %s598
    %v600 = vmul.f32 %v599, %v397
    %v601 = vadd.f32 %v597, %v600
    %s602 = sld [smem:[#allocation8 + $0xd]]
    %v603 = vstv %s602
    %v604 = vadd.f32 %v601, %v603
    %v605 = vmax.f32 %v604, 0.0
    %s606 = sld [smem:[#allocation9 + $0xd]]
    %v607 = vstv %s606
    %v608 = vmul.f32 %v607, %v605
    %v609 = vadd.f32 %v594, %v608
    %s610 = sld [smem:[#allocation4 + $0xe]]
    %v611 = vstv %s610
    %v612 = vmul.f32 %v611, %v230
    %s613 = sld [smem:[#allocation6 + $0xe]]
    %v614 = vstv %s613
    %v615 = vmul.f32 %v614, %v397
    %v616 = vadd.f32 %v612, %v615
    %s617 = sld [smem:[#allocation8 + $0xe]]
    %v618 = vstv %s617
    %v619 = vadd.f32 %v616, %v618
    %v620 = vmax.f32 %v619, 0.0
    %s621 = sld [smem:[#allocation9 + $0xe]]
    %v622 = vstv %s621
    %v623 = vmul.f32 %v622, %v620
    %v624 = vadd.f32 %v609, %v623
    %s625 = sld [smem:[#allocation4 + $0xf]]
    %v626 = vstv %s625
    %v627 = vmul.f32 %v626, %v230
    %s628 = sld [smem:[#allocation6 + $0xf]]
    %v629 = vstv %s628
    %v630 = vmul.f32 %v629, %v397
    %v631 = vadd.f32 %v627, %v630
    %s632 = sld [smem:[#allocation8 + $0xf]]
    %v633 = vstv %s632
    %v634 = vadd.f32 %v631, %v633
    %v635 = vmax.f32 %v634, 0.0
    %s636 = sld [smem:[#allocation9 + $0xf]]
    %v637 = vstv %s636
    %v638 = vmul.f32 %v637, %v635
    %v639 = vadd.f32 %v624, %v638
    %s640 = sld [smem:[#allocation4 + $0x10]]
    %v641 = vstv %s640
    %v642 = vmul.f32 %v641, %v230
    %s643 = sld [smem:[#allocation6 + $0x10]]
    %v644 = vstv %s643
    %v645 = vmul.f32 %v644, %v397
    %v646 = vadd.f32 %v642, %v645
    %s647 = sld [smem:[#allocation8 + $0x10]]
    %v648 = vstv %s647
    %v649 = vadd.f32 %v646, %v648
    %v650 = vmax.f32 %v649, 0.0
    %s651 = sld [smem:[#allocation9 + $0x10]]
    %v652 = vstv %s651
    %v653 = vmul.f32 %v652, %v650
    %v654 = vadd.f32 %v639, %v653
    %s655 = sld [smem:[#allocation4 + $0x11]]
    %v656 = vstv %s655
    %v657 = vmul.f32 %v656, %v230
    %s658 = sld [smem:[#allocation6 + $0x11]]
    %v659 = vstv %s658
    %v660 = vmul.f32 %v659, %v397
    %v661 = vadd.f32 %v657, %v660
    %s662 = sld [smem:[#allocation8 + $0x11]]
    %v663 = vstv %s662
    %v664 = vadd.f32 %v661, %v663
    %v665 = vmax.f32 %v664, 0.0
    %s666 = sld [smem:[#allocation9 + $0x11]]
    %v667 = vstv %s666
    %v668 = vmul.f32 %v667, %v665
    %v669 = vadd.f32 %v654, %v668
    %s670 = sld [smem:[#allocation4 + $0x12]]
    %v671 = vstv %s670
    %v672 = vmul.f32 %v671, %v230
    %s673 = sld [smem:[#allocation6 + $0x12]]
    %v674 = vstv %s673
    %v675 = vmul.f32 %v674, %v397
    %v676 = vadd.f32 %v672, %v675
    %s677 = sld [smem:[#allocation8 + $0x12]]
    %v678 = vstv %s677
    %v679 = vadd.f32 %v676, %v678
    %v680 = vmax.f32 %v679, 0.0
    %s681 = sld [smem:[#allocation9 + $0x12]]
    %v682 = vstv %s681
    %v683 = vmul.f32 %v682, %v680
    %v684 = vadd.f32 %v669, %v683
    %s685 = sld [smem:[#allocation4 + $0x13]]
    %v686 = vstv %s685
    %v687 = vmul.f32 %v686, %v230
    %s688 = sld [smem:[#allocation6 + $0x13]]
    %v689 = vstv %s688
    %v690 = vmul.f32 %v689, %v397
    %v691 = vadd.f32 %v687, %v690
    %s692 = sld [smem:[#allocation8 + $0x13]]
    %v693 = vstv %s692
    %v694 = vadd.f32 %v691, %v693
    %v695 = vmax.f32 %v694, 0.0
    %s696 = sld [smem:[#allocation9 + $0x13]]
    %v697 = vstv %s696
    %v698 = vmul.f32 %v697, %v695
    %v699 = vadd.f32 %v684, %v698
    %s700 = sld [smem:[#allocation4 + $0x14]]
    %v701 = vstv %s700
    %v702 = vmul.f32 %v701, %v230
    %s703 = sld [smem:[#allocation6 + $0x14]]
    %v704 = vstv %s703
    %v705 = vmul.f32 %v704, %v397
    %v706 = vadd.f32 %v702, %v705
    %s707 = sld [smem:[#allocation8 + $0x14]]
    %v708 = vstv %s707
    %v709 = vadd.f32 %v706, %v708
    %v710 = vmax.f32 %v709, 0.0
    %s711 = sld [smem:[#allocation9 + $0x14]]
    %v712 = vstv %s711
    %v713 = vmul.f32 %v712, %v710
    %v714 = vadd.f32 %v699, %v713
    %s715 = sld [smem:[#allocation4 + $0x15]]
    %v716 = vstv %s715
    %v717 = vmul.f32 %v716, %v230
    %s718 = sld [smem:[#allocation6 + $0x15]]
    %v719 = vstv %s718
    %v720 = vmul.f32 %v719, %v397
    %v721 = vadd.f32 %v717, %v720
    %s722 = sld [smem:[#allocation8 + $0x15]]
    %v723 = vstv %s722
    %v724 = vadd.f32 %v721, %v723
    %v725 = vmax.f32 %v724, 0.0
    %s726 = sld [smem:[#allocation9 + $0x15]]
    %v727 = vstv %s726
    %v728 = vmul.f32 %v727, %v725
    %v729 = vadd.f32 %v714, %v728
    %s730 = sld [smem:[#allocation4 + $0x16]]
    %v731 = vstv %s730
    %v732 = vmul.f32 %v731, %v230
    %s733 = sld [smem:[#allocation6 + $0x16]]
    %v734 = vstv %s733
    %v735 = vmul.f32 %v734, %v397
    %v736 = vadd.f32 %v732, %v735
    %s737 = sld [smem:[#allocation8 + $0x16]]
    %v738 = vstv %s737
    %v739 = vadd.f32 %v736, %v738
    %v740 = vmax.f32 %v739, 0.0
    %s741 = sld [smem:[#allocation9 + $0x16]]
    %v742 = vstv %s741
    %v743 = vmul.f32 %v742, %v740
    %v744 = vadd.f32 %v729, %v743
    %s745 = sld [smem:[#allocation4 + $0x17]]
    %v746 = vstv %s745
    %v747 = vmul.f32 %v746, %v230
    %s748 = sld [smem:[#allocation6 + $0x17]]
    %v749 = vstv %s748
    %v750 = vmul.f32 %v749, %v397
    %v751 = vadd.f32 %v747, %v750
    %s752 = sld [smem:[#allocation8 + $0x17]]
    %v753 = vstv %s752
    %v754 = vadd.f32 %v751, %v753
    %v755 = vmax.f32 %v754, 0.0
    %s756 = sld [smem:[#allocation9 + $0x17]]
    %v757 = vstv %s756
    %v758 = vmul.f32 %v757, %v755
    %v759 = vadd.f32 %v744, %v758
    %s760 = sld [smem:[#allocation4 + $0x18]]
    %v761 = vstv %s760
    %v762 = vmul.f32 %v761, %v230
    %s763 = sld [smem:[#allocation6 + $0x18]]
    %v764 = vstv %s763
    %v765 = vmul.f32 %v764, %v397
    %v766 = vadd.f32 %v762, %v765
    %s767 = sld [smem:[#allocation8 + $0x18]]
    %v768 = vstv %s767
    %v769 = vadd.f32 %v766, %v768
    %v770 = vmax.f32 %v769, 0.0
    %s771 = sld [smem:[#allocation9 + $0x18]]
    %v772 = vstv %s771
    %v773 = vmul.f32 %v772, %v770
    %v774 = vadd.f32 %v759, %v773
    %s775 = sld [smem:[#allocation4 + $0x19]]
    %v776 = vstv %s775
    %v777 = vmul.f32 %v776, %v230
    %s778 = sld [smem:[#allocation6 + $0x19]]
    %v779 = vstv %s778
    %v780 = vmul.f32 %v779, %v397
    %v781 = vadd.f32 %v777, %v780
    %s782 = sld [smem:[#allocation8 + $0x19]]
    %v783 = vstv %s782
    %v784 = vadd.f32 %v781, %v783
    %v785 = vmax.f32 %v784, 0.0
    %s786 = sld [smem:[#allocation9 + $0x19]]
    %v787 = vstv %s786
    %v788 = vmul.f32 %v787, %v785
    %v789 = vadd.f32 %v774, %v788
    %s790 = sld [smem:[#allocation4 + $0x1a]]
    %v791 = vstv %s790
    %v792 = vmul.f32 %v791, %v230
    %s793 = sld [smem:[#allocation6 + $0x1a]]
    %v794 = vstv %s793
    %v795 = vmul.f32 %v794, %v397
    %v796 = vadd.f32 %v792, %v795
    %s797 = sld [smem:[#allocation8 + $0x1a]]
    %v798 = vstv %s797
    %v799 = vadd.f32 %v796, %v798
    %v800 = vmax.f32 %v799, 0.0
    %s801 = sld [smem:[#allocation9 + $0x1a]]
    %v802 = vstv %s801
    %v803 = vmul.f32 %v802, %v800
    %v804 = vadd.f32 %v789, %v803
    %s805 = sld [smem:[#allocation4 + $0x1b]]
    %v806 = vstv %s805
    %v807 = vmul.f32 %v806, %v230
    %s808 = sld [smem:[#allocation6 + $0x1b]]
    %v809 = vstv %s808
    %v810 = vmul.f32 %v809, %v397
    %v811 = vadd.f32 %v807, %v810
    %s812 = sld [smem:[#allocation8 + $0x1b]]
    %v813 = vstv %s812
    %v814 = vadd.f32 %v811, %v813
    %v815 = vmax.f32 %v814, 0.0
    %s816 = sld [smem:[#allocation9 + $0x1b]]
    %v817 = vstv %s816
    %v818 = vmul.f32 %v817, %v815
    %v819 = vadd.f32 %v804, %v818
    %s820 = sld [smem:[#allocation4 + $0x1c]]
    %v821 = vstv %s820
    %v822 = vmul.f32 %v821, %v230
    %s823 = sld [smem:[#allocation6 + $0x1c]]
    %v824 = vstv %s823
    %v825 = vmul.f32 %v824, %v397
    %v826 = vadd.f32 %v822, %v825
    %s827 = sld [smem:[#allocation8 + $0x1c]]
    %v828 = vstv %s827
    %v829 = vadd.f32 %v826, %v828
    %v830 = vmax.f32 %v829, 0.0
    %s831 = sld [smem:[#allocation9 + $0x1c]]
    %v832 = vstv %s831
    %v833 = vmul.f32 %v832, %v830
    %v834 = vadd.f32 %v819, %v833
    %s835 = sld [smem:[#allocation4 + $0x1d]]
    %v836 = vstv %s835
    %v837 = vmul.f32 %v836, %v230
    %s838 = sld [smem:[#allocation6 + $0x1d]]
    %v839 = vstv %s838
    %v840 = vmul.f32 %v839, %v397
    %v841 = vadd.f32 %v837, %v840
    %s842 = sld [smem:[#allocation8 + $0x1d]]
    %v843 = vstv %s842
    %v844 = vadd.f32 %v841, %v843
    %v845 = vmax.f32 %v844, 0.0
    %s846 = sld [smem:[#allocation9 + $0x1d]]
    %v847 = vstv %s846
    %v848 = vmul.f32 %v847, %v845
    %v849 = vadd.f32 %v834, %v848
    %s850 = sld [smem:[#allocation4 + $0x1e]]
    %v851 = vstv %s850
    %v852 = vmul.f32 %v851, %v230
    %s853 = sld [smem:[#allocation6 + $0x1e]]
    %v854 = vstv %s853
    %v855 = vmul.f32 %v854, %v397
    %v856 = vadd.f32 %v852, %v855
    %s857 = sld [smem:[#allocation8 + $0x1e]]
    %v858 = vstv %s857
    %v859 = vadd.f32 %v856, %v858
    %v860 = vmax.f32 %v859, 0.0
    %s861 = sld [smem:[#allocation9 + $0x1e]]
    %v862 = vstv %s861
    %v863 = vmul.f32 %v862, %v860
    %v864 = vadd.f32 %v849, %v863
    %s865 = sld [smem:[#allocation4 + $0x1f]]
    %v866 = vstv %s865
    %v867 = vmul.f32 %v866, %v230
    %s868 = sld [smem:[#allocation6 + $0x1f]]
    %v869 = vstv %s868
    %v870 = vmul.f32 %v869, %v397
    %v871 = vadd.f32 %v867, %v870
    %s872 = sld [smem:[#allocation8 + $0x1f]]
    %v873 = vstv %s872
    %v874 = vadd.f32 %v871, %v873
    %v875 = vmax.f32 %v874, 0.0
    %s876 = sld [smem:[#allocation9 + $0x1f]]
    %v877 = vstv %s876
    %v878 = vmul.f32 %v877, %v875
    %v879 = vadd.f32 %v864, %v878
    %s880 = sld [smem:[#allocation3]]
    %v881 = vstv %s880
    %v882 = vadd.f32 %v879, %v881
    %883 = vst [vmem:[%s10] sm:$0x1] %v882
    // Predicated region
    $region58: #{fwd.1} parent=1 // pred_check
      _
    $region59: #{fwd.1} parent=1 // pred_check_branch
      %885 = sbr.rel (0) target = $region61
    $region60: #{fwd.1} parent=1 // pred_region
      _
    $region61: #{fwd.1} parent=1 // pred_fallthru
      _
    // Predicated region
    $region62: #{fwd.1} parent=1 // pred_check
      _
    $region63: #{fwd.1} parent=1 // pred_check_branch
      %887 = sbr.rel (0) target = $region65
    $region64: #{fwd.1} parent=1 // pred_region
      _
    $region65: #{fwd.1} parent=1 // pred_fallthru
      _
    %888 = vsyncpa [#allocation5], 1
    %889 = vsyncpa [#allocation7], 1
    %890 = vsyncpa [#allocation10], 1

</llo_original>
